<compile_context>
chip_gen: v5e
topology: v5e:2x2
jax: 0.10.0
libtpu: 0.0.40
codegen_flags: <defaults>
</compile_context>

<pallas_src>
import functools

import jax
import jax.numpy as jnp
from jax import lax
from jax.experimental import pallas as pl
from jax.experimental.pallas import tpu as pltpu

IN_F = 3
HID = 16
OUT_F = 4
NEG_SLOPE = 0.01  # PyTorch F.leaky_relu default
LANE = 128


def mlp_kernel(w1_ref, b1_ref, w2_ref, b2_ref, x_ref, o_ref, *, chunk_sub):
    """Fused fc1 -> leaky_relu -> (dropout: identity) -> fc2.

    x_ref: (3, r_block, 128) VMEM tile, o_ref: (4, r_block, 128) VMEM tile
    (batch laid out as dense (sublane, lane) slabs per feature).
    w1 (3,16), b1 (16,), w2 (16,4), b2 (4,) live in SMEM; their scalar reads
    are hoisted above the chunk loop so they are not re-fetched per chunk.
    """
    n_chunks = x_ref.shape[1] // chunk_sub

    # Hoist all SMEM scalar reads (132 scalars) out of the chunk loop.
    w1 = [[w1_ref[i, j] for j in range(HID)] for i in range(IN_F)]
    b1 = [b1_ref[j] for j in range(HID)]
    w2 = [[w2_ref[j, m] for m in range(OUT_F)] for j in range(HID)]
    b2 = [b2_ref[m] for m in range(OUT_F)]

    def chunk_body(c, carry):
        r0 = pl.multiple_of(c * chunk_sub, chunk_sub)
        rows = pl.ds(r0, chunk_sub)

        # Dense (chunk_sub, 128) slabs per input feature.
        x0 = x_ref[0, rows, :]
        x1 = x_ref[1, rows, :]
        x2 = x_ref[2, rows, :]

        acc = [None] * OUT_F
        for j in range(HID):
            # fc1 row j: h_j = w1[0,j]*x0 + w1[1,j]*x1 + w1[2,j]*x2 + b1[j]
            h = (w1[0][j] * x0
                 + w1[1][j] * x1
                 + w1[2][j] * x2
                 + b1[j])
            # leaky_relu(0.01): max(h, 0.01*h) is equivalent for 0 < slope < 1.
            h = jnp.maximum(h, NEG_SLOPE * h)
            # TODO(synk): dropout1(p=0.1) uses eval-mode (identity) semantics;
            # training-mode masking (pltpu.prng_* + 1/(1-p) scaling) not implemented.
            # fc2 interleaved so h_j does not stay live: out_m += w2[j,m] * h_j
            for m in range(OUT_F):
                t = w2[j][m] * h
                acc[m] = t if acc[m] is None else acc[m] + t

        for m in range(OUT_F):
            o_ref[m, rows, :] = (acc[m] + b2[m]).astype(o_ref.dtype)
        return carry

    lax.fori_loop(0, n_chunks, chunk_body, 0)


def _round_up(n, m):
    return ((n + m - 1) // m) * m


@functools.partial(jax.jit, static_argnames=("sub_tile", "chunk_sub"))
def model_forward(x, w1, b1, w2, b2, *, sub_tile=256, chunk_sub=32):
    """x: (B, 3) float32 (PyTorch layout). Returns (B, 4).

    sub_tile:  sublane rows (of 128 batch elements) per grid step.
    chunk_sub: sublane rows per register-resident inner chunk.
    """
    assert sub_tile % chunk_sub == 0, "sub_tile must be a multiple of chunk_sub"
    assert chunk_sub % 8 == 0, "chunk_sub must be a multiple of 8 (sublane granule)"
    B = x.shape[0]

    r = -(-B // LANE)                                   # rows of 128 batch elems
    r_block = min(sub_tile, _round_up(r, chunk_sub))    # rows per grid step
    r_pad = _round_up(r, r_block)                       # total padded rows
    b_pad = r_pad * LANE

    # Feature-major once, zero-pad the batch tail, view as (3, rows, 128).
    xt = jnp.pad(x.T, ((0, 0), (0, b_pad - B))).reshape(IN_F, r_pad, LANE)

    out3d = pl.pallas_call(
        functools.partial(mlp_kernel, chunk_sub=chunk_sub),
        out_shape=jax.ShapeDtypeStruct((OUT_F, r_pad, LANE), x.dtype),
        grid=(r_pad // r_block,),
        in_specs=[
            pl.BlockSpec(memory_space=pltpu.MemorySpace.SMEM),    # w1 (3, 16)
            pl.BlockSpec(memory_space=pltpu.MemorySpace.SMEM),    # b1 (16,)
            pl.BlockSpec(memory_space=pltpu.MemorySpace.SMEM),    # w2 (16, 4)
            pl.BlockSpec(memory_space=pltpu.MemorySpace.SMEM),    # b2 (4,)
            pl.BlockSpec((IN_F, r_block, LANE), lambda i: (0, i, 0)),
        ],
        out_specs=pl.BlockSpec((OUT_F, r_block, LANE), lambda i: (0, i, 0)),
        compiler_params=pltpu.CompilerParams(
            dimension_semantics=("parallel",)),
    )(w1, b1, w2, b2, xt)

    return out3d.reshape(OUT_F, b_pad)[:, :B].T


def init_params(key):
    """PyTorch nn.Linear-style init (uniform +/- 1/sqrt(fan_in)).

    Weights stored as (in_features, out_features) = transpose of PyTorch (out, in).
    """
    k1, k2, k3, k4 = jax.random.split(key, 4)
    bound1 = 1.0 / jnp.sqrt(IN_F)
    bound2 = 1.0 / jnp.sqrt(HID)
    w1 = jax.random.uniform(k1, (IN_F, HID), jnp.float32, -bound1, bound1)
    b1 = jax.random.uniform(k2, (HID,), jnp.float32, -bound1, bound1)
    w2 = jax.random.uniform(k3, (HID, OUT_F), jnp.float32, -bound2, bound2)
    b2 = jax.random.uniform(k4, (OUT_F,), jnp.float32, -bound2, bound2)
    return w1, b1, w2, b2


def reference_forward(x, w1, b1, w2, b2):
    h = x @ w1 + b1
    h = jnp.where(h > 0, h, NEG_SLOPE * h)
    return h @ w2 + b2


if __name__ == "__main__":
    key = jax.random.PRNGKey(0)
    kp, kx1, kx2, kx3 = jax.random.split(key, 4)
    w1, b1, w2, b2 = init_params(kp)

    # Small test matching the module's (batch, 3) input.
    B = 8
    x = jax.random.normal(kx1, (B, IN_F), jnp.float32)
    out = jax.block_until_ready(model_forward(x, w1, b1, w2, b2))
    ref = reference_forward(x, w1, b1, w2, b2)
    assert out.shape == (B, OUT_F), out.shape
    assert jnp.allclose(out, ref, atol=1e-5, rtol=1e-5), "mismatch vs reference (B=8)"

    # Tail padding: B not a multiple of the lane/sublane granule.
    B2 = 300
    x2 = jax.random.normal(kx2, (B2, IN_F), jnp.float32)
    out2 = jax.block_until_ready(model_forward(x2, w1, b1, w2, b2))
    ref2 = reference_forward(x2, w1, b1, w2, b2)
    assert out2.shape == (B2, OUT_F), out2.shape
    assert jnp.allclose(out2, ref2, atol=1e-5, rtol=1e-5), "mismatch vs reference (B=300)"

    # Exercise a multi-step grid (grid=(2,)) and the multi-chunk inner loop.
    B3 = 2112
    x3 = jax.random.normal(kx3, (B3, IN_F), jnp.float32)
    out3 = jax.block_until_ready(
        model_forward(x3, w1, b1, w2, b2, sub_tile=16, chunk_sub=8))
    ref3 = reference_forward(x3, w1, b1, w2, b2)
    assert out3.shape == (B3, OUT_F), out3.shape
    assert jnp.allclose(out3, ref3, atol=1e-5, rtol=1e-5), "mismatch vs reference (B=2112)"

    print("KERNEL_OK")
</pallas_src>

<mosaic_0001>
module attributes {stable_mosaic.version = 11 : i64} {
  func.func @mlp_kernel(%arg0: i32, %arg1: memref<3x16xf32, #tpu.memory_space<smem>>, %arg2: memref<16xf32, #tpu.memory_space<smem>>, %arg3: memref<16x4xf32, #tpu.memory_space<smem>>, %arg4: memref<4xf32, #tpu.memory_space<smem>>, %arg5: memref<3x32x128xf32, #tpu.memory_space<vmem>>, %arg6: memref<4x32x128xf32, #tpu.memory_space<vmem>>) attributes {dimension_semantics = [#tpu.dimension_semantics<parallel>], iteration_bounds = array<i64: 1>, scalar_prefetch = 0 : i64, scratch_operands = 0 : i64, tpu.core_type = #tpu.core_type<tc>, window_params = [{transform_indices = @transform_0, window_bounds = array<i64: 3, 16>}, {transform_indices = @transform_1, window_bounds = array<i64: 16>}, {transform_indices = @transform_2, window_bounds = array<i64: 16, 4>}, {transform_indices = @transform_3, window_bounds = array<i64: 4>}, {transform_indices = @transform_4, window_bounds = array<i64: 3, 32, 128>}, {transform_indices = @transform_5, window_bounds = array<i64: 4, 32, 128>}]} {
    %c0 = arith.constant 0 : index
    %c0_0 = arith.constant 0 : index
    %0 = memref.load %arg1[%c0, %c0_0] : memref<3x16xf32, #tpu.memory_space<smem>>
    %c0_1 = arith.constant 0 : index
    %c1 = arith.constant 1 : index
    %1 = memref.load %arg1[%c0_1, %c1] : memref<3x16xf32, #tpu.memory_space<smem>>
    %c0_2 = arith.constant 0 : index
    %c2 = arith.constant 2 : index
    %2 = memref.load %arg1[%c0_2, %c2] : memref<3x16xf32, #tpu.memory_space<smem>>
    %c0_3 = arith.constant 0 : index
    %c3 = arith.constant 3 : index
    %3 = memref.load %arg1[%c0_3, %c3] : memref<3x16xf32, #tpu.memory_space<smem>>
    %c0_4 = arith.constant 0 : index
    %c4 = arith.constant 4 : index
    %4 = memref.load %arg1[%c0_4, %c4] : memref<3x16xf32, #tpu.memory_space<smem>>
    %c0_5 = arith.constant 0 : index
    %c5 = arith.constant 5 : index
    %5 = memref.load %arg1[%c0_5, %c5] : memref<3x16xf32, #tpu.memory_space<smem>>
    %c0_6 = arith.constant 0 : index
    %c6 = arith.constant 6 : index
    %6 = memref.load %arg1[%c0_6, %c6] : memref<3x16xf32, #tpu.memory_space<smem>>
    %c0_7 = arith.constant 0 : index
    %c7 = arith.constant 7 : index
    %7 = memref.load %arg1[%c0_7, %c7] : memref<3x16xf32, #tpu.memory_space<smem>>
    %c0_8 = arith.constant 0 : index
    %c8 = arith.constant 8 : index
    %8 = memref.load %arg1[%c0_8, %c8] : memref<3x16xf32, #tpu.memory_space<smem>>
    %c0_9 = arith.constant 0 : index
    %c9 = arith.constant 9 : index
    %9 = memref.load %arg1[%c0_9, %c9] : memref<3x16xf32, #tpu.memory_space<smem>>
    %c0_10 = arith.constant 0 : index
    %c10 = arith.constant 10 : index
    %10 = memref.load %arg1[%c0_10, %c10] : memref<3x16xf32, #tpu.memory_space<smem>>
    %c0_11 = arith.constant 0 : index
    %c11 = arith.constant 11 : index
    %11 = memref.load %arg1[%c0_11, %c11] : memref<3x16xf32, #tpu.memory_space<smem>>
    %c0_12 = arith.constant 0 : index
    %c12 = arith.constant 12 : index
    %12 = memref.load %arg1[%c0_12, %c12] : memref<3x16xf32, #tpu.memory_space<smem>>
    %c0_13 = arith.constant 0 : index
    %c13 = arith.constant 13 : index
    %13 = memref.load %arg1[%c0_13, %c13] : memref<3x16xf32, #tpu.memory_space<smem>>
    %c0_14 = arith.constant 0 : index
    %c14 = arith.constant 14 : index
    %14 = memref.load %arg1[%c0_14, %c14] : memref<3x16xf32, #tpu.memory_space<smem>>
    %c0_15 = arith.constant 0 : index
    %c15 = arith.constant 15 : index
    %15 = memref.load %arg1[%c0_15, %c15] : memref<3x16xf32, #tpu.memory_space<smem>>
    %c1_16 = arith.constant 1 : index
    %c0_17 = arith.constant 0 : index
    %16 = memref.load %arg1[%c1_16, %c0_17] : memref<3x16xf32, #tpu.memory_space<smem>>
    %c1_18 = arith.constant 1 : index
    %c1_19 = arith.constant 1 : index
    %17 = memref.load %arg1[%c1_18, %c1_19] : memref<3x16xf32, #tpu.memory_space<smem>>
    %c1_20 = arith.constant 1 : index
    %c2_21 = arith.constant 2 : index
    %18 = memref.load %arg1[%c1_20, %c2_21] : memref<3x16xf32, #tpu.memory_space<smem>>
    %c1_22 = arith.constant 1 : index
    %c3_23 = arith.constant 3 : index
    %19 = memref.load %arg1[%c1_22, %c3_23] : memref<3x16xf32, #tpu.memory_space<smem>>
    %c1_24 = arith.constant 1 : index
    %c4_25 = arith.constant 4 : index
    %20 = memref.load %arg1[%c1_24, %c4_25] : memref<3x16xf32, #tpu.memory_space<smem>>
    %c1_26 = arith.constant 1 : index
    %c5_27 = arith.constant 5 : index
    %21 = memref.load %arg1[%c1_26, %c5_27] : memref<3x16xf32, #tpu.memory_space<smem>>
    %c1_28 = arith.constant 1 : index
    %c6_29 = arith.constant 6 : index
    %22 = memref.load %arg1[%c1_28, %c6_29] : memref<3x16xf32, #tpu.memory_space<smem>>
    %c1_30 = arith.constant 1 : index
    %c7_31 = arith.constant 7 : index
    %23 = memref.load %arg1[%c1_30, %c7_31] : memref<3x16xf32, #tpu.memory_space<smem>>
    %c1_32 = arith.constant 1 : index
    %c8_33 = arith.constant 8 : index
    %24 = memref.load %arg1[%c1_32, %c8_33] : memref<3x16xf32, #tpu.memory_space<smem>>
    %c1_34 = arith.constant 1 : index
    %c9_35 = arith.constant 9 : index
    %25 = memref.load %arg1[%c1_34, %c9_35] : memref<3x16xf32, #tpu.memory_space<smem>>
    %c1_36 = arith.constant 1 : index
    %c10_37 = arith.constant 10 : index
    %26 = memref.load %arg1[%c1_36, %c10_37] : memref<3x16xf32, #tpu.memory_space<smem>>
    %c1_38 = arith.constant 1 : index
    %c11_39 = arith.constant 11 : index
    %27 = memref.load %arg1[%c1_38, %c11_39] : memref<3x16xf32, #tpu.memory_space<smem>>
    %c1_40 = arith.constant 1 : index
    %c12_41 = arith.constant 12 : index
    %28 = memref.load %arg1[%c1_40, %c12_41] : memref<3x16xf32, #tpu.memory_space<smem>>
    %c1_42 = arith.constant 1 : index
    %c13_43 = arith.constant 13 : index
    %29 = memref.load %arg1[%c1_42, %c13_43] : memref<3x16xf32, #tpu.memory_space<smem>>
    %c1_44 = arith.constant 1 : index
    %c14_45 = arith.constant 14 : index
    %30 = memref.load %arg1[%c1_44, %c14_45] : memref<3x16xf32, #tpu.memory_space<smem>>
    %c1_46 = arith.constant 1 : index
    %c15_47 = arith.constant 15 : index
    %31 = memref.load %arg1[%c1_46, %c15_47] : memref<3x16xf32, #tpu.memory_space<smem>>
    %c2_48 = arith.constant 2 : index
    %c0_49 = arith.constant 0 : index
    %32 = memref.load %arg1[%c2_48, %c0_49] : memref<3x16xf32, #tpu.memory_space<smem>>
    %c2_50 = arith.constant 2 : index
    %c1_51 = arith.constant 1 : index
    %33 = memref.load %arg1[%c2_50, %c1_51] : memref<3x16xf32, #tpu.memory_space<smem>>
    %c2_52 = arith.constant 2 : index
    %c2_53 = arith.constant 2 : index
    %34 = memref.load %arg1[%c2_52, %c2_53] : memref<3x16xf32, #tpu.memory_space<smem>>
    %c2_54 = arith.constant 2 : index
    %c3_55 = arith.constant 3 : index
    %35 = memref.load %arg1[%c2_54, %c3_55] : memref<3x16xf32, #tpu.memory_space<smem>>
    %c2_56 = arith.constant 2 : index
    %c4_57 = arith.constant 4 : index
    %36 = memref.load %arg1[%c2_56, %c4_57] : memref<3x16xf32, #tpu.memory_space<smem>>
    %c2_58 = arith.constant 2 : index
    %c5_59 = arith.constant 5 : index
    %37 = memref.load %arg1[%c2_58, %c5_59] : memref<3x16xf32, #tpu.memory_space<smem>>
    %c2_60 = arith.constant 2 : index
    %c6_61 = arith.constant 6 : index
    %38 = memref.load %arg1[%c2_60, %c6_61] : memref<3x16xf32, #tpu.memory_space<smem>>
    %c2_62 = arith.constant 2 : index
    %c7_63 = arith.constant 7 : index
    %39 = memref.load %arg1[%c2_62, %c7_63] : memref<3x16xf32, #tpu.memory_space<smem>>
    %c2_64 = arith.constant 2 : index
    %c8_65 = arith.constant 8 : index
    %40 = memref.load %arg1[%c2_64, %c8_65] : memref<3x16xf32, #tpu.memory_space<smem>>
    %c2_66 = arith.constant 2 : index
    %c9_67 = arith.constant 9 : index
    %41 = memref.load %arg1[%c2_66, %c9_67] : memref<3x16xf32, #tpu.memory_space<smem>>
    %c2_68 = arith.constant 2 : index
    %c10_69 = arith.constant 10 : index
    %42 = memref.load %arg1[%c2_68, %c10_69] : memref<3x16xf32, #tpu.memory_space<smem>>
    %c2_70 = arith.constant 2 : index
    %c11_71 = arith.constant 11 : index
    %43 = memref.load %arg1[%c2_70, %c11_71] : memref<3x16xf32, #tpu.memory_space<smem>>
    %c2_72 = arith.constant 2 : index
    %c12_73 = arith.constant 12 : index
    %44 = memref.load %arg1[%c2_72, %c12_73] : memref<3x16xf32, #tpu.memory_space<smem>>
    %c2_74 = arith.constant 2 : index
    %c13_75 = arith.constant 13 : index
    %45 = memref.load %arg1[%c2_74, %c13_75] : memref<3x16xf32, #tpu.memory_space<smem>>
    %c2_76 = arith.constant 2 : index
    %c14_77 = arith.constant 14 : index
    %46 = memref.load %arg1[%c2_76, %c14_77] : memref<3x16xf32, #tpu.memory_space<smem>>
    %c2_78 = arith.constant 2 : index
    %c15_79 = arith.constant 15 : index
    %47 = memref.load %arg1[%c2_78, %c15_79] : memref<3x16xf32, #tpu.memory_space<smem>>
    %c0_80 = arith.constant 0 : index
    %48 = memref.load %arg2[%c0_80] : memref<16xf32, #tpu.memory_space<smem>>
    %c1_81 = arith.constant 1 : index
    %49 = memref.load %arg2[%c1_81] : memref<16xf32, #tpu.memory_space<smem>>
    %c2_82 = arith.constant 2 : index
    %50 = memref.load %arg2[%c2_82] : memref<16xf32, #tpu.memory_space<smem>>
    %c3_83 = arith.constant 3 : index
    %51 = memref.load %arg2[%c3_83] : memref<16xf32, #tpu.memory_space<smem>>
    %c4_84 = arith.constant 4 : index
    %52 = memref.load %arg2[%c4_84] : memref<16xf32, #tpu.memory_space<smem>>
    %c5_85 = arith.constant 5 : index
    %53 = memref.load %arg2[%c5_85] : memref<16xf32, #tpu.memory_space<smem>>
    %c6_86 = arith.constant 6 : index
    %54 = memref.load %arg2[%c6_86] : memref<16xf32, #tpu.memory_space<smem>>
    %c7_87 = arith.constant 7 : index
    %55 = memref.load %arg2[%c7_87] : memref<16xf32, #tpu.memory_space<smem>>
    %c8_88 = arith.constant 8 : index
    %56 = memref.load %arg2[%c8_88] : memref<16xf32, #tpu.memory_space<smem>>
    %c9_89 = arith.constant 9 : index
    %57 = memref.load %arg2[%c9_89] : memref<16xf32, #tpu.memory_space<smem>>
    %c10_90 = arith.constant 10 : index
    %58 = memref.load %arg2[%c10_90] : memref<16xf32, #tpu.memory_space<smem>>
    %c11_91 = arith.constant 11 : index
    %59 = memref.load %arg2[%c11_91] : memref<16xf32, #tpu.memory_space<smem>>
    %c12_92 = arith.constant 12 : index
    %60 = memref.load %arg2[%c12_92] : memref<16xf32, #tpu.memory_space<smem>>
    %c13_93 = arith.constant 13 : index
    %61 = memref.load %arg2[%c13_93] : memref<16xf32, #tpu.memory_space<smem>>
    %c14_94 = arith.constant 14 : index
    %62 = memref.load %arg2[%c14_94] : memref<16xf32, #tpu.memory_space<smem>>
    %c15_95 = arith.constant 15 : index
    %63 = memref.load %arg2[%c15_95] : memref<16xf32, #tpu.memory_space<smem>>
    %c0_96 = arith.constant 0 : index
    %c0_97 = arith.constant 0 : index
    %64 = memref.load %arg3[%c0_96, %c0_97] : memref<16x4xf32, #tpu.memory_space<smem>>
    %c0_98 = arith.constant 0 : index
    %c1_99 = arith.constant 1 : index
    %65 = memref.load %arg3[%c0_98, %c1_99] : memref<16x4xf32, #tpu.memory_space<smem>>
    %c0_100 = arith.constant 0 : index
    %c2_101 = arith.constant 2 : index
    %66 = memref.load %arg3[%c0_100, %c2_101] : memref<16x4xf32, #tpu.memory_space<smem>>
    %c0_102 = arith.constant 0 : index
    %c3_103 = arith.constant 3 : index
    %67 = memref.load %arg3[%c0_102, %c3_103] : memref<16x4xf32, #tpu.memory_space<smem>>
    %c1_104 = arith.constant 1 : index
    %c0_105 = arith.constant 0 : index
    %68 = memref.load %arg3[%c1_104, %c0_105] : memref<16x4xf32, #tpu.memory_space<smem>>
    %c1_106 = arith.constant 1 : index
    %c1_107 = arith.constant 1 : index
    %69 = memref.load %arg3[%c1_106, %c1_107] : memref<16x4xf32, #tpu.memory_space<smem>>
    %c1_108 = arith.constant 1 : index
    %c2_109 = arith.constant 2 : index
    %70 = memref.load %arg3[%c1_108, %c2_109] : memref<16x4xf32, #tpu.memory_space<smem>>
    %c1_110 = arith.constant 1 : index
    %c3_111 = arith.constant 3 : index
    %71 = memref.load %arg3[%c1_110, %c3_111] : memref<16x4xf32, #tpu.memory_space<smem>>
    %c2_112 = arith.constant 2 : index
    %c0_113 = arith.constant 0 : index
    %72 = memref.load %arg3[%c2_112, %c0_113] : memref<16x4xf32, #tpu.memory_space<smem>>
    %c2_114 = arith.constant 2 : index
    %c1_115 = arith.constant 1 : index
    %73 = memref.load %arg3[%c2_114, %c1_115] : memref<16x4xf32, #tpu.memory_space<smem>>
    %c2_116 = arith.constant 2 : index
    %c2_117 = arith.constant 2 : index
    %74 = memref.load %arg3[%c2_116, %c2_117] : memref<16x4xf32, #tpu.memory_space<smem>>
    %c2_118 = arith.constant 2 : index
    %c3_119 = arith.constant 3 : index
    %75 = memref.load %arg3[%c2_118, %c3_119] : memref<16x4xf32, #tpu.memory_space<smem>>
    %c3_120 = arith.constant 3 : index
    %c0_121 = arith.constant 0 : index
    %76 = memref.load %arg3[%c3_120, %c0_121] : memref<16x4xf32, #tpu.memory_space<smem>>
    %c3_122 = arith.constant 3 : index
    %c1_123 = arith.constant 1 : index
    %77 = memref.load %arg3[%c3_122, %c1_123] : memref<16x4xf32, #tpu.memory_space<smem>>
    %c3_124 = arith.constant 3 : index
    %c2_125 = arith.constant 2 : index
    %78 = memref.load %arg3[%c3_124, %c2_125] : memref<16x4xf32, #tpu.memory_space<smem>>
    %c3_126 = arith.constant 3 : index
    %c3_127 = arith.constant 3 : index
    %79 = memref.load %arg3[%c3_126, %c3_127] : memref<16x4xf32, #tpu.memory_space<smem>>
    %c4_128 = arith.constant 4 : index
    %c0_129 = arith.constant 0 : index
    %80 = memref.load %arg3[%c4_128, %c0_129] : memref<16x4xf32, #tpu.memory_space<smem>>
    %c4_130 = arith.constant 4 : index
    %c1_131 = arith.constant 1 : index
    %81 = memref.load %arg3[%c4_130, %c1_131] : memref<16x4xf32, #tpu.memory_space<smem>>
    %c4_132 = arith.constant 4 : index
    %c2_133 = arith.constant 2 : index
    %82 = memref.load %arg3[%c4_132, %c2_133] : memref<16x4xf32, #tpu.memory_space<smem>>
    %c4_134 = arith.constant 4 : index
    %c3_135 = arith.constant 3 : index
    %83 = memref.load %arg3[%c4_134, %c3_135] : memref<16x4xf32, #tpu.memory_space<smem>>
    %c5_136 = arith.constant 5 : index
    %c0_137 = arith.constant 0 : index
    %84 = memref.load %arg3[%c5_136, %c0_137] : memref<16x4xf32, #tpu.memory_space<smem>>
    %c5_138 = arith.constant 5 : index
    %c1_139 = arith.constant 1 : index
    %85 = memref.load %arg3[%c5_138, %c1_139] : memref<16x4xf32, #tpu.memory_space<smem>>
    %c5_140 = arith.constant 5 : index
    %c2_141 = arith.constant 2 : index
    %86 = memref.load %arg3[%c5_140, %c2_141] : memref<16x4xf32, #tpu.memory_space<smem>>
    %c5_142 = arith.constant 5 : index
    %c3_143 = arith.constant 3 : index
    %87 = memref.load %arg3[%c5_142, %c3_143] : memref<16x4xf32, #tpu.memory_space<smem>>
    %c6_144 = arith.constant 6 : index
    %c0_145 = arith.constant 0 : index
    %88 = memref.load %arg3[%c6_144, %c0_145] : memref<16x4xf32, #tpu.memory_space<smem>>
    %c6_146 = arith.constant 6 : index
    %c1_147 = arith.constant 1 : index
    %89 = memref.load %arg3[%c6_146, %c1_147] : memref<16x4xf32, #tpu.memory_space<smem>>
    %c6_148 = arith.constant 6 : index
    %c2_149 = arith.constant 2 : index
    %90 = memref.load %arg3[%c6_148, %c2_149] : memref<16x4xf32, #tpu.memory_space<smem>>
    %c6_150 = arith.constant 6 : index
    %c3_151 = arith.constant 3 : index
    %91 = memref.load %arg3[%c6_150, %c3_151] : memref<16x4xf32, #tpu.memory_space<smem>>
    %c7_152 = arith.constant 7 : index
    %c0_153 = arith.constant 0 : index
    %92 = memref.load %arg3[%c7_152, %c0_153] : memref<16x4xf32, #tpu.memory_space<smem>>
    %c7_154 = arith.constant 7 : index
    %c1_155 = arith.constant 1 : index
    %93 = memref.load %arg3[%c7_154, %c1_155] : memref<16x4xf32, #tpu.memory_space<smem>>
    %c7_156 = arith.constant 7 : index
    %c2_157 = arith.constant 2 : index
    %94 = memref.load %arg3[%c7_156, %c2_157] : memref<16x4xf32, #tpu.memory_space<smem>>
    %c7_158 = arith.constant 7 : index
    %c3_159 = arith.constant 3 : index
    %95 = memref.load %arg3[%c7_158, %c3_159] : memref<16x4xf32, #tpu.memory_space<smem>>
    %c8_160 = arith.constant 8 : index
    %c0_161 = arith.constant 0 : index
    %96 = memref.load %arg3[%c8_160, %c0_161] : memref<16x4xf32, #tpu.memory_space<smem>>
    %c8_162 = arith.constant 8 : index
    %c1_163 = arith.constant 1 : index
    %97 = memref.load %arg3[%c8_162, %c1_163] : memref<16x4xf32, #tpu.memory_space<smem>>
    %c8_164 = arith.constant 8 : index
    %c2_165 = arith.constant 2 : index
    %98 = memref.load %arg3[%c8_164, %c2_165] : memref<16x4xf32, #tpu.memory_space<smem>>
    %c8_166 = arith.constant 8 : index
    %c3_167 = arith.constant 3 : index
    %99 = memref.load %arg3[%c8_166, %c3_167] : memref<16x4xf32, #tpu.memory_space<smem>>
    %c9_168 = arith.constant 9 : index
    %c0_169 = arith.constant 0 : index
    %100 = memref.load %arg3[%c9_168, %c0_169] : memref<16x4xf32, #tpu.memory_space<smem>>
    %c9_170 = arith.constant 9 : index
    %c1_171 = arith.constant 1 : index
    %101 = memref.load %arg3[%c9_170, %c1_171] : memref<16x4xf32, #tpu.memory_space<smem>>
    %c9_172 = arith.constant 9 : index
    %c2_173 = arith.constant 2 : index
    %102 = memref.load %arg3[%c9_172, %c2_173] : memref<16x4xf32, #tpu.memory_space<smem>>
    %c9_174 = arith.constant 9 : index
    %c3_175 = arith.constant 3 : index
    %103 = memref.load %arg3[%c9_174, %c3_175] : memref<16x4xf32, #tpu.memory_space<smem>>
    %c10_176 = arith.constant 10 : index
    %c0_177 = arith.constant 0 : index
    %104 = memref.load %arg3[%c10_176, %c0_177] : memref<16x4xf32, #tpu.memory_space<smem>>
    %c10_178 = arith.constant 10 : index
    %c1_179 = arith.constant 1 : index
    %105 = memref.load %arg3[%c10_178, %c1_179] : memref<16x4xf32, #tpu.memory_space<smem>>
    %c10_180 = arith.constant 10 : index
    %c2_181 = arith.constant 2 : index
    %106 = memref.load %arg3[%c10_180, %c2_181] : memref<16x4xf32, #tpu.memory_space<smem>>
    %c10_182 = arith.constant 10 : index
    %c3_183 = arith.constant 3 : index
    %107 = memref.load %arg3[%c10_182, %c3_183] : memref<16x4xf32, #tpu.memory_space<smem>>
    %c11_184 = arith.constant 11 : index
    %c0_185 = arith.constant 0 : index
    %108 = memref.load %arg3[%c11_184, %c0_185] : memref<16x4xf32, #tpu.memory_space<smem>>
    %c11_186 = arith.constant 11 : index
    %c1_187 = arith.constant 1 : index
    %109 = memref.load %arg3[%c11_186, %c1_187] : memref<16x4xf32, #tpu.memory_space<smem>>
    %c11_188 = arith.constant 11 : index
    %c2_189 = arith.constant 2 : index
    %110 = memref.load %arg3[%c11_188, %c2_189] : memref<16x4xf32, #tpu.memory_space<smem>>
    %c11_190 = arith.constant 11 : index
    %c3_191 = arith.constant 3 : index
    %111 = memref.load %arg3[%c11_190, %c3_191] : memref<16x4xf32, #tpu.memory_space<smem>>
    %c12_192 = arith.constant 12 : index
    %c0_193 = arith.constant 0 : index
    %112 = memref.load %arg3[%c12_192, %c0_193] : memref<16x4xf32, #tpu.memory_space<smem>>
    %c12_194 = arith.constant 12 : index
    %c1_195 = arith.constant 1 : index
    %113 = memref.load %arg3[%c12_194, %c1_195] : memref<16x4xf32, #tpu.memory_space<smem>>
    %c12_196 = arith.constant 12 : index
    %c2_197 = arith.constant 2 : index
    %114 = memref.load %arg3[%c12_196, %c2_197] : memref<16x4xf32, #tpu.memory_space<smem>>
    %c12_198 = arith.constant 12 : index
    %c3_199 = arith.constant 3 : index
    %115 = memref.load %arg3[%c12_198, %c3_199] : memref<16x4xf32, #tpu.memory_space<smem>>
    %c13_200 = arith.constant 13 : index
    %c0_201 = arith.constant 0 : index
    %116 = memref.load %arg3[%c13_200, %c0_201] : memref<16x4xf32, #tpu.memory_space<smem>>
    %c13_202 = arith.constant 13 : index
    %c1_203 = arith.constant 1 : index
    %117 = memref.load %arg3[%c13_202, %c1_203] : memref<16x4xf32, #tpu.memory_space<smem>>
    %c13_204 = arith.constant 13 : index
    %c2_205 = arith.constant 2 : index
    %118 = memref.load %arg3[%c13_204, %c2_205] : memref<16x4xf32, #tpu.memory_space<smem>>
    %c13_206 = arith.constant 13 : index
    %c3_207 = arith.constant 3 : index
    %119 = memref.load %arg3[%c13_206, %c3_207] : memref<16x4xf32, #tpu.memory_space<smem>>
    %c14_208 = arith.constant 14 : index
    %c0_209 = arith.constant 0 : index
    %120 = memref.load %arg3[%c14_208, %c0_209] : memref<16x4xf32, #tpu.memory_space<smem>>
    %c14_210 = arith.constant 14 : index
    %c1_211 = arith.constant 1 : index
    %121 = memref.load %arg3[%c14_210, %c1_211] : memref<16x4xf32, #tpu.memory_space<smem>>
    %c14_212 = arith.constant 14 : index
    %c2_213 = arith.constant 2 : index
    %122 = memref.load %arg3[%c14_212, %c2_213] : memref<16x4xf32, #tpu.memory_space<smem>>
    %c14_214 = arith.constant 14 : index
    %c3_215 = arith.constant 3 : index
    %123 = memref.load %arg3[%c14_214, %c3_215] : memref<16x4xf32, #tpu.memory_space<smem>>
    %c15_216 = arith.constant 15 : index
    %c0_217 = arith.constant 0 : index
    %124 = memref.load %arg3[%c15_216, %c0_217] : memref<16x4xf32, #tpu.memory_space<smem>>
    %c15_218 = arith.constant 15 : index
    %c1_219 = arith.constant 1 : index
    %125 = memref.load %arg3[%c15_218, %c1_219] : memref<16x4xf32, #tpu.memory_space<smem>>
    %c15_220 = arith.constant 15 : index
    %c2_221 = arith.constant 2 : index
    %126 = memref.load %arg3[%c15_220, %c2_221] : memref<16x4xf32, #tpu.memory_space<smem>>
    %c15_222 = arith.constant 15 : index
    %c3_223 = arith.constant 3 : index
    %127 = memref.load %arg3[%c15_222, %c3_223] : memref<16x4xf32, #tpu.memory_space<smem>>
    %c0_224 = arith.constant 0 : index
    %128 = memref.load %arg4[%c0_224] : memref<4xf32, #tpu.memory_space<smem>>
    %c1_225 = arith.constant 1 : index
    %129 = memref.load %arg4[%c1_225] : memref<4xf32, #tpu.memory_space<smem>>
    %c2_226 = arith.constant 2 : index
    %130 = memref.load %arg4[%c2_226] : memref<4xf32, #tpu.memory_space<smem>>
    %c3_227 = arith.constant 3 : index
    %131 = memref.load %arg4[%c3_227] : memref<4xf32, #tpu.memory_space<smem>>
    %c0_i32 = arith.constant 0 : i32
    %c32_i32 = arith.constant 32 : i32
    %132 = arith.muli %c0_i32, %c32_i32 : i32
    %133 = tpu.assume_multiple %132, 32 : i32
    %c0_228 = arith.constant 0 : index
    %134 = arith.index_cast %133 : i32 to index
    %c0_229 = arith.constant 0 : index
    %135 = vector.load %arg5[%c0_228, %134, %c0_229] : memref<3x32x128xf32, #tpu.memory_space<vmem>>, vector<1x32x128xf32>
    %136 = vector.shape_cast %135 : vector<1x32x128xf32> to vector<32x128xf32>
    %c1_230 = arith.constant 1 : index
    %137 = arith.index_cast %133 : i32 to index
    %c0_231 = arith.constant 0 : index
    %138 = vector.load %arg5[%c1_230, %137, %c0_231] : memref<3x32x128xf32, #tpu.memory_space<vmem>>, vector<1x32x128xf32>
    %139 = vector.shape_cast %138 : vector<1x32x128xf32> to vector<32x128xf32>
    %c2_232 = arith.constant 2 : index
    %140 = arith.index_cast %133 : i32 to index
    %c0_233 = arith.constant 0 : index
    %141 = vector.load %arg5[%c2_232, %140, %c0_233] : memref<3x32x128xf32, #tpu.memory_space<vmem>>, vector<1x32x128xf32>
    %142 = vector.shape_cast %141 : vector<1x32x128xf32> to vector<32x128xf32>
    %143 = vector.broadcast %0 : f32 to vector<32x128xf32>
    %144 = arith.mulf %143, %136 : vector<32x128xf32>
    %145 = vector.broadcast %16 : f32 to vector<32x128xf32>
    %146 = arith.mulf %145, %139 : vector<32x128xf32>
    %147 = arith.addf %144, %146 : vector<32x128xf32>
    %148 = vector.broadcast %32 : f32 to vector<32x128xf32>
    %149 = arith.mulf %148, %142 : vector<32x128xf32>
    %150 = arith.addf %147, %149 : vector<32x128xf32>
    %151 = vector.broadcast %48 : f32 to vector<32x128xf32>
    %152 = arith.addf %150, %151 : vector<32x128xf32>
    %cst = arith.constant 0.00999999977 : f32
    %153 = vector.broadcast %cst : f32 to vector<32x128xf32>
    %154 = arith.mulf %153, %152 : vector<32x128xf32>
    %155 = arith.maximumf %152, %154 : vector<32x128xf32>
    %156 = vector.broadcast %64 : f32 to vector<32x128xf32>
    %157 = arith.mulf %156, %155 : vector<32x128xf32>
    %158 = vector.broadcast %65 : f32 to vector<32x128xf32>
    %159 = arith.mulf %158, %155 : vector<32x128xf32>
    %160 = vector.broadcast %66 : f32 to vector<32x128xf32>
    %161 = arith.mulf %160, %155 : vector<32x128xf32>
    %162 = vector.broadcast %67 : f32 to vector<32x128xf32>
    %163 = arith.mulf %162, %155 : vector<32x128xf32>
    %164 = vector.broadcast %1 : f32 to vector<32x128xf32>
    %165 = arith.mulf %164, %136 : vector<32x128xf32>
    %166 = vector.broadcast %17 : f32 to vector<32x128xf32>
    %167 = arith.mulf %166, %139 : vector<32x128xf32>
    %168 = arith.addf %165, %167 : vector<32x128xf32>
    %169 = vector.broadcast %33 : f32 to vector<32x128xf32>
    %170 = arith.mulf %169, %142 : vector<32x128xf32>
    %171 = arith.addf %168, %170 : vector<32x128xf32>
    %172 = vector.broadcast %49 : f32 to vector<32x128xf32>
    %173 = arith.addf %171, %172 : vector<32x128xf32>
    %cst_234 = arith.constant 0.00999999977 : f32
    %174 = vector.broadcast %cst_234 : f32 to vector<32x128xf32>
    %175 = arith.mulf %174, %173 : vector<32x128xf32>
    %176 = arith.maximumf %173, %175 : vector<32x128xf32>
    %177 = vector.broadcast %68 : f32 to vector<32x128xf32>
    %178 = arith.mulf %177, %176 : vector<32x128xf32>
    %179 = arith.addf %157, %178 : vector<32x128xf32>
    %180 = vector.broadcast %69 : f32 to vector<32x128xf32>
    %181 = arith.mulf %180, %176 : vector<32x128xf32>
    %182 = arith.addf %159, %181 : vector<32x128xf32>
    %183 = vector.broadcast %70 : f32 to vector<32x128xf32>
    %184 = arith.mulf %183, %176 : vector<32x128xf32>
    %185 = arith.addf %161, %184 : vector<32x128xf32>
    %186 = vector.broadcast %71 : f32 to vector<32x128xf32>
    %187 = arith.mulf %186, %176 : vector<32x128xf32>
    %188 = arith.addf %163, %187 : vector<32x128xf32>
    %189 = vector.broadcast %2 : f32 to vector<32x128xf32>
    %190 = arith.mulf %189, %136 : vector<32x128xf32>
    %191 = vector.broadcast %18 : f32 to vector<32x128xf32>
    %192 = arith.mulf %191, %139 : vector<32x128xf32>
    %193 = arith.addf %190, %192 : vector<32x128xf32>
    %194 = vector.broadcast %34 : f32 to vector<32x128xf32>
    %195 = arith.mulf %194, %142 : vector<32x128xf32>
    %196 = arith.addf %193, %195 : vector<32x128xf32>
    %197 = vector.broadcast %50 : f32 to vector<32x128xf32>
    %198 = arith.addf %196, %197 : vector<32x128xf32>
    %cst_235 = arith.constant 0.00999999977 : f32
    %199 = vector.broadcast %cst_235 : f32 to vector<32x128xf32>
    %200 = arith.mulf %199, %198 : vector<32x128xf32>
    %201 = arith.maximumf %198, %200 : vector<32x128xf32>
    %202 = vector.broadcast %72 : f32 to vector<32x128xf32>
    %203 = arith.mulf %202, %201 : vector<32x128xf32>
    %204 = arith.addf %179, %203 : vector<32x128xf32>
    %205 = vector.broadcast %73 : f32 to vector<32x128xf32>
    %206 = arith.mulf %205, %201 : vector<32x128xf32>
    %207 = arith.addf %182, %206 : vector<32x128xf32>
    %208 = vector.broadcast %74 : f32 to vector<32x128xf32>
    %209 = arith.mulf %208, %201 : vector<32x128xf32>
    %210 = arith.addf %185, %209 : vector<32x128xf32>
    %211 = vector.broadcast %75 : f32 to vector<32x128xf32>
    %212 = arith.mulf %211, %201 : vector<32x128xf32>
    %213 = arith.addf %188, %212 : vector<32x128xf32>
    %214 = vector.broadcast %3 : f32 to vector<32x128xf32>
    %215 = arith.mulf %214, %136 : vector<32x128xf32>
    %216 = vector.broadcast %19 : f32 to vector<32x128xf32>
    %217 = arith.mulf %216, %139 : vector<32x128xf32>
    %218 = arith.addf %215, %217 : vector<32x128xf32>
    %219 = vector.broadcast %35 : f32 to vector<32x128xf32>
    %220 = arith.mulf %219, %142 : vector<32x128xf32>
    %221 = arith.addf %218, %220 : vector<32x128xf32>
    %222 = vector.broadcast %51 : f32 to vector<32x128xf32>
    %223 = arith.addf %221, %222 : vector<32x128xf32>
    %cst_236 = arith.constant 0.00999999977 : f32
    %224 = vector.broadcast %cst_236 : f32 to vector<32x128xf32>
    %225 = arith.mulf %224, %223 : vector<32x128xf32>
    %226 = arith.maximumf %223, %225 : vector<32x128xf32>
    %227 = vector.broadcast %76 : f32 to vector<32x128xf32>
    %228 = arith.mulf %227, %226 : vector<32x128xf32>
    %229 = arith.addf %204, %228 : vector<32x128xf32>
    %230 = vector.broadcast %77 : f32 to vector<32x128xf32>
    %231 = arith.mulf %230, %226 : vector<32x128xf32>
    %232 = arith.addf %207, %231 : vector<32x128xf32>
    %233 = vector.broadcast %78 : f32 to vector<32x128xf32>
    %234 = arith.mulf %233, %226 : vector<32x128xf32>
    %235 = arith.addf %210, %234 : vector<32x128xf32>
    %236 = vector.broadcast %79 : f32 to vector<32x128xf32>
    %237 = arith.mulf %236, %226 : vector<32x128xf32>
    %238 = arith.addf %213, %237 : vector<32x128xf32>
    %239 = vector.broadcast %4 : f32 to vector<32x128xf32>
    %240 = arith.mulf %239, %136 : vector<32x128xf32>
    %241 = vector.broadcast %20 : f32 to vector<32x128xf32>
    %242 = arith.mulf %241, %139 : vector<32x128xf32>
    %243 = arith.addf %240, %242 : vector<32x128xf32>
    %244 = vector.broadcast %36 : f32 to vector<32x128xf32>
    %245 = arith.mulf %244, %142 : vector<32x128xf32>
    %246 = arith.addf %243, %245 : vector<32x128xf32>
    %247 = vector.broadcast %52 : f32 to vector<32x128xf32>
    %248 = arith.addf %246, %247 : vector<32x128xf32>
    %cst_237 = arith.constant 0.00999999977 : f32
    %249 = vector.broadcast %cst_237 : f32 to vector<32x128xf32>
    %250 = arith.mulf %249, %248 : vector<32x128xf32>
    %251 = arith.maximumf %248, %250 : vector<32x128xf32>
    %252 = vector.broadcast %80 : f32 to vector<32x128xf32>
    %253 = arith.mulf %252, %251 : vector<32x128xf32>
    %254 = arith.addf %229, %253 : vector<32x128xf32>
    %255 = vector.broadcast %81 : f32 to vector<32x128xf32>
    %256 = arith.mulf %255, %251 : vector<32x128xf32>
    %257 = arith.addf %232, %256 : vector<32x128xf32>
    %258 = vector.broadcast %82 : f32 to vector<32x128xf32>
    %259 = arith.mulf %258, %251 : vector<32x128xf32>
    %260 = arith.addf %235, %259 : vector<32x128xf32>
    %261 = vector.broadcast %83 : f32 to vector<32x128xf32>
    %262 = arith.mulf %261, %251 : vector<32x128xf32>
    %263 = arith.addf %238, %262 : vector<32x128xf32>
    %264 = vector.broadcast %5 : f32 to vector<32x128xf32>
    %265 = arith.mulf %264, %136 : vector<32x128xf32>
    %266 = vector.broadcast %21 : f32 to vector<32x128xf32>
    %267 = arith.mulf %266, %139 : vector<32x128xf32>
    %268 = arith.addf %265, %267 : vector<32x128xf32>
    %269 = vector.broadcast %37 : f32 to vector<32x128xf32>
    %270 = arith.mulf %269, %142 : vector<32x128xf32>
    %271 = arith.addf %268, %270 : vector<32x128xf32>
    %272 = vector.broadcast %53 : f32 to vector<32x128xf32>
    %273 = arith.addf %271, %272 : vector<32x128xf32>
    %cst_238 = arith.constant 0.00999999977 : f32
    %274 = vector.broadcast %cst_238 : f32 to vector<32x128xf32>
    %275 = arith.mulf %274, %273 : vector<32x128xf32>
    %276 = arith.maximumf %273, %275 : vector<32x128xf32>
    %277 = vector.broadcast %84 : f32 to vector<32x128xf32>
    %278 = arith.mulf %277, %276 : vector<32x128xf32>
    %279 = arith.addf %254, %278 : vector<32x128xf32>
    %280 = vector.broadcast %85 : f32 to vector<32x128xf32>
    %281 = arith.mulf %280, %276 : vector<32x128xf32>
    %282 = arith.addf %257, %281 : vector<32x128xf32>
    %283 = vector.broadcast %86 : f32 to vector<32x128xf32>
    %284 = arith.mulf %283, %276 : vector<32x128xf32>
    %285 = arith.addf %260, %284 : vector<32x128xf32>
    %286 = vector.broadcast %87 : f32 to vector<32x128xf32>
    %287 = arith.mulf %286, %276 : vector<32x128xf32>
    %288 = arith.addf %263, %287 : vector<32x128xf32>
    %289 = vector.broadcast %6 : f32 to vector<32x128xf32>
    %290 = arith.mulf %289, %136 : vector<32x128xf32>
    %291 = vector.broadcast %22 : f32 to vector<32x128xf32>
    %292 = arith.mulf %291, %139 : vector<32x128xf32>
    %293 = arith.addf %290, %292 : vector<32x128xf32>
    %294 = vector.broadcast %38 : f32 to vector<32x128xf32>
    %295 = arith.mulf %294, %142 : vector<32x128xf32>
    %296 = arith.addf %293, %295 : vector<32x128xf32>
    %297 = vector.broadcast %54 : f32 to vector<32x128xf32>
    %298 = arith.addf %296, %297 : vector<32x128xf32>
    %cst_239 = arith.constant 0.00999999977 : f32
    %299 = vector.broadcast %cst_239 : f32 to vector<32x128xf32>
    %300 = arith.mulf %299, %298 : vector<32x128xf32>
    %301 = arith.maximumf %298, %300 : vector<32x128xf32>
    %302 = vector.broadcast %88 : f32 to vector<32x128xf32>
    %303 = arith.mulf %302, %301 : vector<32x128xf32>
    %304 = arith.addf %279, %303 : vector<32x128xf32>
    %305 = vector.broadcast %89 : f32 to vector<32x128xf32>
    %306 = arith.mulf %305, %301 : vector<32x128xf32>
    %307 = arith.addf %282, %306 : vector<32x128xf32>
    %308 = vector.broadcast %90 : f32 to vector<32x128xf32>
    %309 = arith.mulf %308, %301 : vector<32x128xf32>
    %310 = arith.addf %285, %309 : vector<32x128xf32>
    %311 = vector.broadcast %91 : f32 to vector<32x128xf32>
    %312 = arith.mulf %311, %301 : vector<32x128xf32>
    %313 = arith.addf %288, %312 : vector<32x128xf32>
    %314 = vector.broadcast %7 : f32 to vector<32x128xf32>
    %315 = arith.mulf %314, %136 : vector<32x128xf32>
    %316 = vector.broadcast %23 : f32 to vector<32x128xf32>
    %317 = arith.mulf %316, %139 : vector<32x128xf32>
    %318 = arith.addf %315, %317 : vector<32x128xf32>
    %319 = vector.broadcast %39 : f32 to vector<32x128xf32>
    %320 = arith.mulf %319, %142 : vector<32x128xf32>
    %321 = arith.addf %318, %320 : vector<32x128xf32>
    %322 = vector.broadcast %55 : f32 to vector<32x128xf32>
    %323 = arith.addf %321, %322 : vector<32x128xf32>
    %cst_240 = arith.constant 0.00999999977 : f32
    %324 = vector.broadcast %cst_240 : f32 to vector<32x128xf32>
    %325 = arith.mulf %324, %323 : vector<32x128xf32>
    %326 = arith.maximumf %323, %325 : vector<32x128xf32>
    %327 = vector.broadcast %92 : f32 to vector<32x128xf32>
    %328 = arith.mulf %327, %326 : vector<32x128xf32>
    %329 = arith.addf %304, %328 : vector<32x128xf32>
    %330 = vector.broadcast %93 : f32 to vector<32x128xf32>
    %331 = arith.mulf %330, %326 : vector<32x128xf32>
    %332 = arith.addf %307, %331 : vector<32x128xf32>
    %333 = vector.broadcast %94 : f32 to vector<32x128xf32>
    %334 = arith.mulf %333, %326 : vector<32x128xf32>
    %335 = arith.addf %310, %334 : vector<32x128xf32>
    %336 = vector.broadcast %95 : f32 to vector<32x128xf32>
    %337 = arith.mulf %336, %326 : vector<32x128xf32>
    %338 = arith.addf %313, %337 : vector<32x128xf32>
    %339 = vector.broadcast %8 : f32 to vector<32x128xf32>
    %340 = arith.mulf %339, %136 : vector<32x128xf32>
    %341 = vector.broadcast %24 : f32 to vector<32x128xf32>
    %342 = arith.mulf %341, %139 : vector<32x128xf32>
    %343 = arith.addf %340, %342 : vector<32x128xf32>
    %344 = vector.broadcast %40 : f32 to vector<32x128xf32>
    %345 = arith.mulf %344, %142 : vector<32x128xf32>
    %346 = arith.addf %343, %345 : vector<32x128xf32>
    %347 = vector.broadcast %56 : f32 to vector<32x128xf32>
    %348 = arith.addf %346, %347 : vector<32x128xf32>
    %cst_241 = arith.constant 0.00999999977 : f32
    %349 = vector.broadcast %cst_241 : f32 to vector<32x128xf32>
    %350 = arith.mulf %349, %348 : vector<32x128xf32>
    %351 = arith.maximumf %348, %350 : vector<32x128xf32>
    %352 = vector.broadcast %96 : f32 to vector<32x128xf32>
    %353 = arith.mulf %352, %351 : vector<32x128xf32>
    %354 = arith.addf %329, %353 : vector<32x128xf32>
    %355 = vector.broadcast %97 : f32 to vector<32x128xf32>
    %356 = arith.mulf %355, %351 : vector<32x128xf32>
    %357 = arith.addf %332, %356 : vector<32x128xf32>
    %358 = vector.broadcast %98 : f32 to vector<32x128xf32>
    %359 = arith.mulf %358, %351 : vector<32x128xf32>
    %360 = arith.addf %335, %359 : vector<32x128xf32>
    %361 = vector.broadcast %99 : f32 to vector<32x128xf32>
    %362 = arith.mulf %361, %351 : vector<32x128xf32>
    %363 = arith.addf %338, %362 : vector<32x128xf32>
    %364 = vector.broadcast %9 : f32 to vector<32x128xf32>
    %365 = arith.mulf %364, %136 : vector<32x128xf32>
    %366 = vector.broadcast %25 : f32 to vector<32x128xf32>
    %367 = arith.mulf %366, %139 : vector<32x128xf32>
    %368 = arith.addf %365, %367 : vector<32x128xf32>
    %369 = vector.broadcast %41 : f32 to vector<32x128xf32>
    %370 = arith.mulf %369, %142 : vector<32x128xf32>
    %371 = arith.addf %368, %370 : vector<32x128xf32>
    %372 = vector.broadcast %57 : f32 to vector<32x128xf32>
    %373 = arith.addf %371, %372 : vector<32x128xf32>
    %cst_242 = arith.constant 0.00999999977 : f32
    %374 = vector.broadcast %cst_242 : f32 to vector<32x128xf32>
    %375 = arith.mulf %374, %373 : vector<32x128xf32>
    %376 = arith.maximumf %373, %375 : vector<32x128xf32>
    %377 = vector.broadcast %100 : f32 to vector<32x128xf32>
    %378 = arith.mulf %377, %376 : vector<32x128xf32>
    %379 = arith.addf %354, %378 : vector<32x128xf32>
    %380 = vector.broadcast %101 : f32 to vector<32x128xf32>
    %381 = arith.mulf %380, %376 : vector<32x128xf32>
    %382 = arith.addf %357, %381 : vector<32x128xf32>
    %383 = vector.broadcast %102 : f32 to vector<32x128xf32>
    %384 = arith.mulf %383, %376 : vector<32x128xf32>
    %385 = arith.addf %360, %384 : vector<32x128xf32>
    %386 = vector.broadcast %103 : f32 to vector<32x128xf32>
    %387 = arith.mulf %386, %376 : vector<32x128xf32>
    %388 = arith.addf %363, %387 : vector<32x128xf32>
    %389 = vector.broadcast %10 : f32 to vector<32x128xf32>
    %390 = arith.mulf %389, %136 : vector<32x128xf32>
    %391 = vector.broadcast %26 : f32 to vector<32x128xf32>
    %392 = arith.mulf %391, %139 : vector<32x128xf32>
    %393 = arith.addf %390, %392 : vector<32x128xf32>
    %394 = vector.broadcast %42 : f32 to vector<32x128xf32>
    %395 = arith.mulf %394, %142 : vector<32x128xf32>
    %396 = arith.addf %393, %395 : vector<32x128xf32>
    %397 = vector.broadcast %58 : f32 to vector<32x128xf32>
    %398 = arith.addf %396, %397 : vector<32x128xf32>
    %cst_243 = arith.constant 0.00999999977 : f32
    %399 = vector.broadcast %cst_243 : f32 to vector<32x128xf32>
    %400 = arith.mulf %399, %398 : vector<32x128xf32>
    %401 = arith.maximumf %398, %400 : vector<32x128xf32>
    %402 = vector.broadcast %104 : f32 to vector<32x128xf32>
    %403 = arith.mulf %402, %401 : vector<32x128xf32>
    %404 = arith.addf %379, %403 : vector<32x128xf32>
    %405 = vector.broadcast %105 : f32 to vector<32x128xf32>
    %406 = arith.mulf %405, %401 : vector<32x128xf32>
    %407 = arith.addf %382, %406 : vector<32x128xf32>
    %408 = vector.broadcast %106 : f32 to vector<32x128xf32>
    %409 = arith.mulf %408, %401 : vector<32x128xf32>
    %410 = arith.addf %385, %409 : vector<32x128xf32>
    %411 = vector.broadcast %107 : f32 to vector<32x128xf32>
    %412 = arith.mulf %411, %401 : vector<32x128xf32>
    %413 = arith.addf %388, %412 : vector<32x128xf32>
    %414 = vector.broadcast %11 : f32 to vector<32x128xf32>
    %415 = arith.mulf %414, %136 : vector<32x128xf32>
    %416 = vector.broadcast %27 : f32 to vector<32x128xf32>
    %417 = arith.mulf %416, %139 : vector<32x128xf32>
    %418 = arith.addf %415, %417 : vector<32x128xf32>
    %419 = vector.broadcast %43 : f32 to vector<32x128xf32>
    %420 = arith.mulf %419, %142 : vector<32x128xf32>
    %421 = arith.addf %418, %420 : vector<32x128xf32>
    %422 = vector.broadcast %59 : f32 to vector<32x128xf32>
    %423 = arith.addf %421, %422 : vector<32x128xf32>
    %cst_244 = arith.constant 0.00999999977 : f32
    %424 = vector.broadcast %cst_244 : f32 to vector<32x128xf32>
    %425 = arith.mulf %424, %423 : vector<32x128xf32>
    %426 = arith.maximumf %423, %425 : vector<32x128xf32>
    %427 = vector.broadcast %108 : f32 to vector<32x128xf32>
    %428 = arith.mulf %427, %426 : vector<32x128xf32>
    %429 = arith.addf %404, %428 : vector<32x128xf32>
    %430 = vector.broadcast %109 : f32 to vector<32x128xf32>
    %431 = arith.mulf %430, %426 : vector<32x128xf32>
    %432 = arith.addf %407, %431 : vector<32x128xf32>
    %433 = vector.broadcast %110 : f32 to vector<32x128xf32>
    %434 = arith.mulf %433, %426 : vector<32x128xf32>
    %435 = arith.addf %410, %434 : vector<32x128xf32>
    %436 = vector.broadcast %111 : f32 to vector<32x128xf32>
    %437 = arith.mulf %436, %426 : vector<32x128xf32>
    %438 = arith.addf %413, %437 : vector<32x128xf32>
    %439 = vector.broadcast %12 : f32 to vector<32x128xf32>
    %440 = arith.mulf %439, %136 : vector<32x128xf32>
    %441 = vector.broadcast %28 : f32 to vector<32x128xf32>
    %442 = arith.mulf %441, %139 : vector<32x128xf32>
    %443 = arith.addf %440, %442 : vector<32x128xf32>
    %444 = vector.broadcast %44 : f32 to vector<32x128xf32>
    %445 = arith.mulf %444, %142 : vector<32x128xf32>
    %446 = arith.addf %443, %445 : vector<32x128xf32>
    %447 = vector.broadcast %60 : f32 to vector<32x128xf32>
    %448 = arith.addf %446, %447 : vector<32x128xf32>
    %cst_245 = arith.constant 0.00999999977 : f32
    %449 = vector.broadcast %cst_245 : f32 to vector<32x128xf32>
    %450 = arith.mulf %449, %448 : vector<32x128xf32>
    %451 = arith.maximumf %448, %450 : vector<32x128xf32>
    %452 = vector.broadcast %112 : f32 to vector<32x128xf32>
    %453 = arith.mulf %452, %451 : vector<32x128xf32>
    %454 = arith.addf %429, %453 : vector<32x128xf32>
    %455 = vector.broadcast %113 : f32 to vector<32x128xf32>
    %456 = arith.mulf %455, %451 : vector<32x128xf32>
    %457 = arith.addf %432, %456 : vector<32x128xf32>
    %458 = vector.broadcast %114 : f32 to vector<32x128xf32>
    %459 = arith.mulf %458, %451 : vector<32x128xf32>
    %460 = arith.addf %435, %459 : vector<32x128xf32>
    %461 = vector.broadcast %115 : f32 to vector<32x128xf32>
    %462 = arith.mulf %461, %451 : vector<32x128xf32>
    %463 = arith.addf %438, %462 : vector<32x128xf32>
    %464 = vector.broadcast %13 : f32 to vector<32x128xf32>
    %465 = arith.mulf %464, %136 : vector<32x128xf32>
    %466 = vector.broadcast %29 : f32 to vector<32x128xf32>
    %467 = arith.mulf %466, %139 : vector<32x128xf32>
    %468 = arith.addf %465, %467 : vector<32x128xf32>
    %469 = vector.broadcast %45 : f32 to vector<32x128xf32>
    %470 = arith.mulf %469, %142 : vector<32x128xf32>
    %471 = arith.addf %468, %470 : vector<32x128xf32>
    %472 = vector.broadcast %61 : f32 to vector<32x128xf32>
    %473 = arith.addf %471, %472 : vector<32x128xf32>
    %cst_246 = arith.constant 0.00999999977 : f32
    %474 = vector.broadcast %cst_246 : f32 to vector<32x128xf32>
    %475 = arith.mulf %474, %473 : vector<32x128xf32>
    %476 = arith.maximumf %473, %475 : vector<32x128xf32>
    %477 = vector.broadcast %116 : f32 to vector<32x128xf32>
    %478 = arith.mulf %477, %476 : vector<32x128xf32>
    %479 = arith.addf %454, %478 : vector<32x128xf32>
    %480 = vector.broadcast %117 : f32 to vector<32x128xf32>
    %481 = arith.mulf %480, %476 : vector<32x128xf32>
    %482 = arith.addf %457, %481 : vector<32x128xf32>
    %483 = vector.broadcast %118 : f32 to vector<32x128xf32>
    %484 = arith.mulf %483, %476 : vector<32x128xf32>
    %485 = arith.addf %460, %484 : vector<32x128xf32>
    %486 = vector.broadcast %119 : f32 to vector<32x128xf32>
    %487 = arith.mulf %486, %476 : vector<32x128xf32>
    %488 = arith.addf %463, %487 : vector<32x128xf32>
    %489 = vector.broadcast %14 : f32 to vector<32x128xf32>
    %490 = arith.mulf %489, %136 : vector<32x128xf32>
    %491 = vector.broadcast %30 : f32 to vector<32x128xf32>
    %492 = arith.mulf %491, %139 : vector<32x128xf32>
    %493 = arith.addf %490, %492 : vector<32x128xf32>
    %494 = vector.broadcast %46 : f32 to vector<32x128xf32>
    %495 = arith.mulf %494, %142 : vector<32x128xf32>
    %496 = arith.addf %493, %495 : vector<32x128xf32>
    %497 = vector.broadcast %62 : f32 to vector<32x128xf32>
    %498 = arith.addf %496, %497 : vector<32x128xf32>
    %cst_247 = arith.constant 0.00999999977 : f32
    %499 = vector.broadcast %cst_247 : f32 to vector<32x128xf32>
    %500 = arith.mulf %499, %498 : vector<32x128xf32>
    %501 = arith.maximumf %498, %500 : vector<32x128xf32>
    %502 = vector.broadcast %120 : f32 to vector<32x128xf32>
    %503 = arith.mulf %502, %501 : vector<32x128xf32>
    %504 = arith.addf %479, %503 : vector<32x128xf32>
    %505 = vector.broadcast %121 : f32 to vector<32x128xf32>
    %506 = arith.mulf %505, %501 : vector<32x128xf32>
    %507 = arith.addf %482, %506 : vector<32x128xf32>
    %508 = vector.broadcast %122 : f32 to vector<32x128xf32>
    %509 = arith.mulf %508, %501 : vector<32x128xf32>
    %510 = arith.addf %485, %509 : vector<32x128xf32>
    %511 = vector.broadcast %123 : f32 to vector<32x128xf32>
    %512 = arith.mulf %511, %501 : vector<32x128xf32>
    %513 = arith.addf %488, %512 : vector<32x128xf32>
    %514 = vector.broadcast %15 : f32 to vector<32x128xf32>
    %515 = arith.mulf %514, %136 : vector<32x128xf32>
    %516 = vector.broadcast %31 : f32 to vector<32x128xf32>
    %517 = arith.mulf %516, %139 : vector<32x128xf32>
    %518 = arith.addf %515, %517 : vector<32x128xf32>
    %519 = vector.broadcast %47 : f32 to vector<32x128xf32>
    %520 = arith.mulf %519, %142 : vector<32x128xf32>
    %521 = arith.addf %518, %520 : vector<32x128xf32>
    %522 = vector.broadcast %63 : f32 to vector<32x128xf32>
    %523 = arith.addf %521, %522 : vector<32x128xf32>
    %cst_248 = arith.constant 0.00999999977 : f32
    %524 = vector.broadcast %cst_248 : f32 to vector<32x128xf32>
    %525 = arith.mulf %524, %523 : vector<32x128xf32>
    %526 = arith.maximumf %523, %525 : vector<32x128xf32>
    %527 = vector.broadcast %124 : f32 to vector<32x128xf32>
    %528 = arith.mulf %527, %526 : vector<32x128xf32>
    %529 = arith.addf %504, %528 : vector<32x128xf32>
    %530 = vector.broadcast %125 : f32 to vector<32x128xf32>
    %531 = arith.mulf %530, %526 : vector<32x128xf32>
    %532 = arith.addf %507, %531 : vector<32x128xf32>
    %533 = vector.broadcast %126 : f32 to vector<32x128xf32>
    %534 = arith.mulf %533, %526 : vector<32x128xf32>
    %535 = arith.addf %510, %534 : vector<32x128xf32>
    %536 = vector.broadcast %127 : f32 to vector<32x128xf32>
    %537 = arith.mulf %536, %526 : vector<32x128xf32>
    %538 = arith.addf %513, %537 : vector<32x128xf32>
    %539 = vector.broadcast %128 : f32 to vector<32x128xf32>
    %540 = arith.addf %529, %539 : vector<32x128xf32>
    %c0_249 = arith.constant 0 : index
    %541 = arith.index_cast %133 : i32 to index
    %c0_250 = arith.constant 0 : index
    %542 = vector.load %arg6[%c0_249, %541, %c0_250] : memref<4x32x128xf32, #tpu.memory_space<vmem>>, vector<1x32x128xf32>
    %543 = vector.shape_cast %542 : vector<1x32x128xf32> to vector<32x128xf32>
    %544 = vector.shape_cast %540 : vector<32x128xf32> to vector<1x32x128xf32>
    tpu.vector_store %arg6[%c0_249, %541, %c0_250], %544 {strides = array<i32>} : memref<4x32x128xf32, #tpu.memory_space<vmem>>, vector<1x32x128xf32>,
    %545 = vector.broadcast %129 : f32 to vector<32x128xf32>
    %546 = arith.addf %532, %545 : vector<32x128xf32>
    %c1_251 = arith.constant 1 : index
    %547 = arith.index_cast %133 : i32 to index
    %c0_252 = arith.constant 0 : index
    %548 = vector.load %arg6[%c1_251, %547, %c0_252] : memref<4x32x128xf32, #tpu.memory_space<vmem>>, vector<1x32x128xf32>
    %549 = vector.shape_cast %548 : vector<1x32x128xf32> to vector<32x128xf32>
    %550 = vector.shape_cast %546 : vector<32x128xf32> to vector<1x32x128xf32>
    tpu.vector_store %arg6[%c1_251, %547, %c0_252], %550 {strides = array<i32>} : memref<4x32x128xf32, #tpu.memory_space<vmem>>, vector<1x32x128xf32>,
    %551 = vector.broadcast %130 : f32 to vector<32x128xf32>
    %552 = arith.addf %535, %551 : vector<32x128xf32>
    %c2_253 = arith.constant 2 : index
    %553 = arith.index_cast %133 : i32 to index
    %c0_254 = arith.constant 0 : index
    %554 = vector.load %arg6[%c2_253, %553, %c0_254] : memref<4x32x128xf32, #tpu.memory_space<vmem>>, vector<1x32x128xf32>
    %555 = vector.shape_cast %554 : vector<1x32x128xf32> to vector<32x128xf32>
    %556 = vector.shape_cast %552 : vector<32x128xf32> to vector<1x32x128xf32>
    tpu.vector_store %arg6[%c2_253, %553, %c0_254], %556 {strides = array<i32>} : memref<4x32x128xf32, #tpu.memory_space<vmem>>, vector<1x32x128xf32>,
    %557 = vector.broadcast %131 : f32 to vector<32x128xf32>
    %558 = arith.addf %538, %557 : vector<32x128xf32>
    %c3_255 = arith.constant 3 : index
    %559 = arith.index_cast %133 : i32 to index
    %c0_256 = arith.constant 0 : index
    %560 = vector.load %arg6[%c3_255, %559, %c0_256] : memref<4x32x128xf32, #tpu.memory_space<vmem>>, vector<1x32x128xf32>
    %561 = vector.shape_cast %560 : vector<1x32x128xf32> to vector<32x128xf32>
    %562 = vector.shape_cast %558 : vector<32x128xf32> to vector<1x32x128xf32>
    tpu.vector_store %arg6[%c3_255, %559, %c0_256], %562 {strides = array<i32>} : memref<4x32x128xf32, #tpu.memory_space<vmem>>, vector<1x32x128xf32>,
    %c1_i32 = arith.constant 1 : i32
    return
  }
  func.func @transform_0(%arg0: i32) -> (i32, i32) {
    %c0_i32 = arith.constant 0 : i32
    %c0_i32_0 = arith.constant 0 : i32
    %c0_i32_1 = arith.constant 0 : i32
    return %c0_i32, %c0_i32_0 : i32, i32
  }
  func.func @transform_1(%arg0: i32) -> i32 {
    %c0_i32 = arith.constant 0 : i32
    %c0_i32_0 = arith.constant 0 : i32
    return %c0_i32 : i32
  }
  func.func @transform_2(%arg0: i32) -> (i32, i32) {
    %c0_i32 = arith.constant 0 : i32
    %c0_i32_0 = arith.constant 0 : i32
    %c0_i32_1 = arith.constant 0 : i32
    return %c0_i32, %c0_i32_0 : i32, i32
  }
  func.func @transform_3(%arg0: i32) -> i32 {
    %c0_i32 = arith.constant 0 : i32
    %c0_i32_0 = arith.constant 0 : i32
    return %c0_i32 : i32
  }
  func.func @transform_4(%arg0: i32) -> (i32, i32, i32) {
    %c0_i32 = arith.constant 0 : i32
    %c0_i32_0 = arith.constant 0 : i32
    %c0_i32_1 = arith.constant 0 : i32
    return %c0_i32, %arg0, %c0_i32_0 : i32, i32, i32
  }
  func.func @transform_5(%arg0: i32) -> (i32, i32, i32) {
    %c0_i32 = arith.constant 0 : i32
    %c0_i32_0 = arith.constant 0 : i32
    %c0_i32_1 = arith.constant 0 : i32
    return %c0_i32, %arg0, %c0_i32_0 : i32, i32, i32
  }
}

</mosaic_0001>

<llo_original>
// kernel: model_forward.1
$region0: #{model_forward.1}
  #allocation0 [shape = 'u32[]', space=smem, size = 0x4, offset = 0x4, fixed_abs, tag = 'smem constant byte address 0x4 - core index']
  #allocation1 [shape = 'u32[72,128]{1,0:T(1,128)}', space=vmem, size = 0x9000, scoped, tag = 'internal scratch']
  %s0 = inlined_call_operand.vmem [shape: f32[3,16], index: 0, kind: input, shape index: {}]
  %s1 = inlined_call_operand.vmem [shape: f32[16], index: 1, kind: input, shape index: {}]
  %s2 = inlined_call_operand.vmem [shape: f32[16,4], index: 2, kind: input, shape index: {}]
  %s3 = inlined_call_operand.vmem [shape: f32[4], index: 3, kind: input, shape index: {}]
  %s4 = inlined_call_operand.vmem [shape: f32[3,32,128], index: 4, kind: input, shape index: {}]
  %s5 = inlined_call_operand.vmem [shape: f32[4,32,128], index: 5, kind: output, shape index: {}]
  %s6 = sld [smem:[#allocation0]]
  $region46: #{model_forward.1} parent=0
    _
  %s8 = ssub.s32 1, %s6
  %s9 = scalar_select 0, %s8, %s6
  $region1: #{model_forward.1} parent=0
    #allocation2 [shape = 'u8[2048]{0}', space=smem, size = 0x800, scoped, tag = 'input window, operand 0, single buffered']
    #allocation3 [shape = 's32[1]{0}', space=sflag, size = 0x4, scoped, tag = 'scoped memory for model_forward.1']
    #allocation4 [shape = 'u8[512]{0}', space=smem, size = 0x200, scoped, tag = 'input window, operand 1, single buffered']
    #allocation5 [shape = 's32[1]{0}', space=sflag, size = 0x4, scoped, tag = 'scoped memory for model_forward.1']
    #allocation6 [shape = 'u8[8192]{0}', space=smem, size = 0x2000, scoped, tag = 'input window, operand 2, single buffered']
    #allocation7 [shape = 'u8[512]{0}', space=smem, size = 0x200, scoped, tag = 'input window, operand 3, single buffered']
    #allocation8 [shape = 's32[1]{0}', space=sflag, size = 0x4, scoped, tag = 'scoped memory for model_forward.1']
    %10 = vsyncpa [#allocation3], 0
    %11 = vsyncpa [#allocation5], 0
    %12 = vsyncpa [#allocation8], 0
    // Predicated region
    $region2: #{model_forward.1} parent=1 // pred_check
      _
    $region3: #{model_forward.1} parent=1 // pred_check_branch
      %14 = sbr.rel (0) target = $region5
    $region4: #{model_forward.1} parent=1 // pred_region
      %16 = vsyncadd [#allocation3], 0
      %s18 = sshll.u32 %s0, 4
      %s19 = int_to_ptr.vmem [resolvable:$true] %s18
      %21 = dma.vmem_to_smem %s19, 64, [#allocation2], [#allocation3]
    $region5: #{model_forward.1} parent=1 // pred_fallthru
      _
    // Predicated region
    $region6: #{model_forward.1} parent=1 // pred_check
      _
    $region7: #{model_forward.1} parent=1 // pred_check_branch
      %23 = sbr.rel (0) target = $region9
    $region8: #{model_forward.1} parent=1 // pred_region
      %25 = vsyncadd [#allocation5], 0
      %s27 = sshll.u32 %s1, 4
      %s28 = int_to_ptr.vmem [resolvable:$true] %s27
      %30 = dma.vmem_to_smem %s28, 16, [#allocation4], [#allocation5]
    $region9: #{model_forward.1} parent=1 // pred_fallthru
      _
    // Predicated region
    $region10: #{model_forward.1} parent=1 // pred_check
      _
    $region11: #{model_forward.1} parent=1 // pred_check_branch
      %32 = sbr.rel (0) target = $region13
    $region12: #{model_forward.1} parent=1 // pred_region
      %34 = vsyncadd [#allocation5], 0
      %s35 = sshll.u32 %s2, 4
      %s36 = int_to_ptr.vmem [resolvable:$true] %s35
      %41 = dma.vmem_to_smem %s36, 256, [#allocation6], [#allocation5], 128, 128, 8
    $region13: #{model_forward.1} parent=1 // pred_fallthru
      _
    // Predicated region
    $region14: #{model_forward.1} parent=1 // pred_check
      _
    $region15: #{model_forward.1} parent=1 // pred_check_branch
      %43 = sbr.rel (0) target = $region17
    $region16: #{model_forward.1} parent=1 // pred_region
      %45 = vsyncadd [#allocation8], 0
      %s47 = sshll.u32 %s3, 4
      %s48 = int_to_ptr.vmem [resolvable:$true] %s47
      %50 = dma.vmem_to_smem %s48, 16, [#allocation7], [#allocation8]
    $region17: #{model_forward.1} parent=1 // pred_fallthru
      _
    // Predicated region
    $region18: #{model_forward.1} parent=1 // pred_check
      _
    $region19: #{model_forward.1} parent=1 // pred_check_branch
      %52 = sbr.rel (0) target = $region21
    $region20: #{model_forward.1} parent=1 // pred_region
      _
    $region21: #{model_forward.1} parent=1 // pred_fallthru
      _
    // Predicated region
    $region22: #{model_forward.1} parent=1 // pred_check
      _
    $region23: #{model_forward.1} parent=1 // pred_check_branch
      %54 = sbr.rel (0) target = $region25
    $region24: #{model_forward.1} parent=1 // pred_region
      %56 = dma.done [#allocation3], 64
    $region25: #{model_forward.1} parent=1 // pred_fallthru
      _
    // Predicated region
    $region26: #{model_forward.1} parent=1 // pred_check
      _
    $region27: #{model_forward.1} parent=1 // pred_check_branch
      %58 = sbr.rel (0) target = $region29
    $region28: #{model_forward.1} parent=1 // pred_region
      %60 = dma.done [#allocation5], 16
    $region29: #{model_forward.1} parent=1 // pred_fallthru
      _
    // Predicated region
    $region30: #{model_forward.1} parent=1 // pred_check
      _
    $region31: #{model_forward.1} parent=1 // pred_check_branch
      %62 = sbr.rel (0) target = $region33
    $region32: #{model_forward.1} parent=1 // pred_region
      %64 = dma.done [#allocation5], 256
    $region33: #{model_forward.1} parent=1 // pred_fallthru
      _
    // Predicated region
    $region34: #{model_forward.1} parent=1 // pred_check
      _
    $region35: #{model_forward.1} parent=1 // pred_check_branch
      %66 = sbr.rel (0) target = $region37
    $region36: #{model_forward.1} parent=1 // pred_region
      %68 = dma.done [#allocation8], 16
    $region37: #{model_forward.1} parent=1 // pred_fallthru
      _
    %69 = sfence
    %s70 = sld [smem:[#allocation2]]
    %s71 = sld [smem:[#allocation2 + $0x1]]
    %s72 = sld [smem:[#allocation2 + $0x2]]
    %s73 = sld [smem:[#allocation2 + $0x3]]
    %s74 = sld [smem:[#allocation2 + $0x4]]
    %s75 = sld [smem:[#allocation2 + $0x5]]
    %s76 = sld [smem:[#allocation2 + $0x6]]
    %s77 = sld [smem:[#allocation2 + $0x7]]
    %s78 = sld [smem:[#allocation2 + $0x8]]
    %s79 = sld [smem:[#allocation2 + $0x9]]
    %s80 = sld [smem:[#allocation2 + $0xa]]
    %s81 = sld [smem:[#allocation2 + $0xb]]
    %s82 = sld [smem:[#allocation2 + $0xc]]
    %s83 = sld [smem:[#allocation2 + $0xd]]
    %s84 = sld [smem:[#allocation2 + $0xe]]
    %s85 = sld [smem:[#allocation2 + $0xf]]
    %s86 = sld [smem:[#allocation2 + $0x80]]
    %s87 = sld [smem:[#allocation2 + $0x81]]
    %s88 = sld [smem:[#allocation2 + $0x82]]
    %s89 = sld [smem:[#allocation2 + $0x83]]
    %s90 = sld [smem:[#allocation2 + $0x84]]
    %s91 = sld [smem:[#allocation2 + $0x85]]
    %s92 = sld [smem:[#allocation2 + $0x86]]
    %s93 = sld [smem:[#allocation2 + $0x87]]
    %s94 = sld [smem:[#allocation2 + $0x88]]
    %s95 = sld [smem:[#allocation2 + $0x89]]
    %s96 = sld [smem:[#allocation2 + $0x8a]]
    %s97 = sld [smem:[#allocation2 + $0x8b]]
    %s98 = sld [smem:[#allocation2 + $0x8c]]
    %s99 = sld [smem:[#allocation2 + $0x8d]]
    %s100 = sld [smem:[#allocation2 + $0x8e]]
    %s101 = sld [smem:[#allocation2 + $0x8f]]
    %s102 = sld [smem:[#allocation2 + $0x100]]
    %s103 = sld [smem:[#allocation2 + $0x101]]
    %s104 = sld [smem:[#allocation2 + $0x102]]
    %s105 = sld [smem:[#allocation2 + $0x103]]
    %s106 = sld [smem:[#allocation2 + $0x104]]
    %s107 = sld [smem:[#allocation2 + $0x105]]
    %s108 = sld [smem:[#allocation2 + $0x106]]
    %s109 = sld [smem:[#allocation2 + $0x107]]
    %s110 = sld [smem:[#allocation2 + $0x108]]
    %s111 = sld [smem:[#allocation2 + $0x109]]
    %s112 = sld [smem:[#allocation2 + $0x10a]]
    %s113 = sld [smem:[#allocation2 + $0x10b]]
    %s114 = sld [smem:[#allocation2 + $0x10c]]
    %s115 = sld [smem:[#allocation2 + $0x10d]]
    %s116 = sld [smem:[#allocation2 + $0x10e]]
    %s117 = sld [smem:[#allocation2 + $0x10f]]
    %s118 = sld [smem:[#allocation4]]
    %s119 = sld [smem:[#allocation4 + $0x1]]
    %s120 = sld [smem:[#allocation4 + $0x2]]
    %s121 = sld [smem:[#allocation4 + $0x3]]
    %s122 = sld [smem:[#allocation4 + $0x4]]
    %s123 = sld [smem:[#allocation4 + $0x5]]
    %s124 = sld [smem:[#allocation4 + $0x6]]
    %s125 = sld [smem:[#allocation4 + $0x7]]
    %s126 = sld [smem:[#allocation4 + $0x8]]
    %s127 = sld [smem:[#allocation4 + $0x9]]
    %s128 = sld [smem:[#allocation4 + $0xa]]
    %s129 = sld [smem:[#allocation4 + $0xb]]
    %s130 = sld [smem:[#allocation4 + $0xc]]
    %s131 = sld [smem:[#allocation4 + $0xd]]
    %s132 = sld [smem:[#allocation4 + $0xe]]
    %s133 = sld [smem:[#allocation4 + $0xf]]
    %s134 = sld [smem:[#allocation6]]
    %s135 = sld [smem:[#allocation6 + $0x1]]
    %s136 = sld [smem:[#allocation6 + $0x2]]
    %s137 = sld [smem:[#allocation6 + $0x3]]
    %s138 = sld [smem:[#allocation6 + $0x80]]
    %s139 = sld [smem:[#allocation6 + $0x81]]
    %s140 = sld [smem:[#allocation6 + $0x82]]
    %s141 = sld [smem:[#allocation6 + $0x83]]
    %s142 = sld [smem:[#allocation6 + $0x100]]
    %s143 = sld [smem:[#allocation6 + $0x101]]
    %s144 = sld [smem:[#allocation6 + $0x102]]
    %s145 = sld [smem:[#allocation6 + $0x103]]
    %s146 = sld [smem:[#allocation6 + $0x180]]
    %s147 = sld [smem:[#allocation6 + $0x181]]
    %s148 = sld [smem:[#allocation6 + $0x182]]
    %s149 = sld [smem:[#allocation6 + $0x183]]
    %s150 = sld [smem:[#allocation6 + $0x200]]
    %s151 = sld [smem:[#allocation6 + $0x201]]
    %s152 = sld [smem:[#allocation6 + $0x202]]
    %s153 = sld [smem:[#allocation6 + $0x203]]
    %s154 = sld [smem:[#allocation6 + $0x280]]
    %s155 = sld [smem:[#allocation6 + $0x281]]
    %s156 = sld [smem:[#allocation6 + $0x282]]
    %s157 = sld [smem:[#allocation6 + $0x283]]
    %s158 = sld [smem:[#allocation6 + $0x300]]
    %s159 = sld [smem:[#allocation6 + $0x301]]
    %s160 = sld [smem:[#allocation6 + $0x302]]
    %s161 = sld [smem:[#allocation6 + $0x303]]
    %s162 = sld [smem:[#allocation6 + $0x380]]
    %s163 = sld [smem:[#allocation6 + $0x381]]
    %s164 = sld [smem:[#allocation6 + $0x382]]
    %s165 = sld [smem:[#allocation6 + $0x383]]
    %s166 = sld [smem:[#allocation6 + $0x400]]
    %s167 = sld [smem:[#allocation6 + $0x401]]
    %s168 = sld [smem:[#allocation6 + $0x402]]
    %s169 = sld [smem:[#allocation6 + $0x403]]
    %s170 = sld [smem:[#allocation6 + $0x480]]
    %s171 = sld [smem:[#allocation6 + $0x481]]
    %s172 = sld [smem:[#allocation6 + $0x482]]
    %s173 = sld [smem:[#allocation6 + $0x483]]
    %s174 = sld [smem:[#allocation6 + $0x500]]
    %s175 = sld [smem:[#allocation6 + $0x501]]
    %s176 = sld [smem:[#allocation6 + $0x502]]
    %s177 = sld [smem:[#allocation6 + $0x503]]
    %s178 = sld [smem:[#allocation6 + $0x580]]
    %s179 = sld [smem:[#allocation6 + $0x581]]
    %s180 = sld [smem:[#allocation6 + $0x582]]
    %s181 = sld [smem:[#allocation6 + $0x583]]
    %s182 = sld [smem:[#allocation6 + $0x600]]
    %s183 = sld [smem:[#allocation6 + $0x601]]
    %s184 = sld [smem:[#allocation6 + $0x602]]
    %s185 = sld [smem:[#allocation6 + $0x603]]
    %s186 = sld [smem:[#allocation6 + $0x680]]
    %s187 = sld [smem:[#allocation6 + $0x681]]
    %s188 = sld [smem:[#allocation6 + $0x682]]
    %s189 = sld [smem:[#allocation6 + $0x683]]
    %s190 = sld [smem:[#allocation6 + $0x700]]
    %s191 = sld [smem:[#allocation6 + $0x701]]
    %s192 = sld [smem:[#allocation6 + $0x702]]
    %s193 = sld [smem:[#allocation6 + $0x703]]
    %s194 = sld [smem:[#allocation6 + $0x780]]
    %s195 = sld [smem:[#allocation6 + $0x781]]
    %s196 = sld [smem:[#allocation6 + $0x782]]
    %s197 = sld [smem:[#allocation6 + $0x783]]
    %s198 = sld [smem:[#allocation7]]
    %s199 = sld [smem:[#allocation7 + $0x1]]
    %s200 = sld [smem:[#allocation7 + $0x2]]
    %s201 = sld [smem:[#allocation7 + $0x3]]
    %v202 = vld [vmem:[%s4] sm:$0xff]
    %v203 = vld [vmem:[%s4 + $0x8] sm:$0xff]
    %v204 = vld [vmem:[%s4 + $0x10] sm:$0xff]
    %v205 = vld [vmem:[%s4 + $0x18] sm:$0xff]
    %s206 = sadd.s32 0, 32
    %s207 = scalar_lea.vmem %s4, %s206
    %v208 = vld [vmem:[%s207] sm:$0xff]
    %v209 = vld [vmem:[%s207 + $0x8] sm:$0xff]
    %v210 = vld [vmem:[%s207 + $0x10] sm:$0xff]
    %v211 = vld [vmem:[%s207 + $0x18] sm:$0xff]
    %s212 = sadd.s32 0, 64
    %s213 = scalar_lea.vmem %s4, %s212
    %v214 = vld [vmem:[%s213] sm:$0xff]
    %v215 = vld [vmem:[%s213 + $0x8] sm:$0xff]
    %v216 = vld [vmem:[%s213 + $0x10] sm:$0xff]
    %v217 = vld [vmem:[%s213 + $0x18] sm:$0xff]
    %v218 = vstv %s70
    %v219 = vmul.f32 %v218, %v202
    %v220 = vmul.f32 %v218, %v203
    %v221 = vmul.f32 %v218, %v204
    %v222 = vmul.f32 %v218, %v205
    %v223 = vstv %s86
    %v224 = vmul.f32 %v223, %v208
    %v225 = vmul.f32 %v223, %v209
    %v226 = vmul.f32 %v223, %v210
    %v227 = vmul.f32 %v223, %v211
    %v228 = vadd.f32 %v219, %v224
    %v229 = vadd.f32 %v220, %v225
    %v230 = vadd.f32 %v221, %v226
    %v231 = vadd.f32 %v222, %v227
    %v232 = vstv %s102
    %v233 = vmul.f32 %v232, %v214
    %v234 = vmul.f32 %v232, %v215
    %v235 = vmul.f32 %v232, %v216
    %v236 = vmul.f32 %v232, %v217
    %v237 = vadd.f32 %v228, %v233
    %v238 = vadd.f32 %v229, %v234
    %v239 = vadd.f32 %v230, %v235
    %v240 = vadd.f32 %v231, %v236
    %v241 = vstv %s118
    %v242 = vadd.f32 %v237, %v241
    %v243 = vadd.f32 %v238, %v241
    %v244 = vadd.f32 %v239, %v241
    %v245 = vadd.f32 %v240, %v241
    %v246 = vmul.f32 %v242, 0.01
    %v247 = vmul.f32 %v243, 0.01
    %v248 = vmul.f32 %v244, 0.01
    %v249 = vmul.f32 %v245, 0.01
    %v250 = vmax.f32 %v242, %v246
    %v251 = vmax.f32 %v243, %v247
    %v252 = vmax.f32 %v244, %v248
    %v253 = vmax.f32 %v245, %v249
    %v254 = vstv %s134
    %v255 = vmul.f32 %v254, %v250
    %v256 = vmul.f32 %v254, %v251
    %v257 = vmul.f32 %v254, %v252
    %v258 = vmul.f32 %v254, %v253
    %v259 = vstv %s135
    %v260 = vmul.f32 %v259, %v250
    %v261 = vmul.f32 %v259, %v251
    %v262 = vmul.f32 %v259, %v252
    %v263 = vmul.f32 %v259, %v253
    %v264 = vstv %s136
    %v265 = vmul.f32 %v264, %v250
    %v266 = vmul.f32 %v264, %v251
    %v267 = vmul.f32 %v264, %v252
    %v268 = vmul.f32 %v264, %v253
    %v269 = vstv %s137
    %v270 = vmul.f32 %v269, %v250
    %v271 = vmul.f32 %v269, %v251
    %v272 = vmul.f32 %v269, %v252
    %v273 = vmul.f32 %v269, %v253
    %v274 = vstv %s71
    %v275 = vmul.f32 %v274, %v202
    %v276 = vmul.f32 %v274, %v203
    %v277 = vmul.f32 %v274, %v204
    %v278 = vmul.f32 %v274, %v205
    %v279 = vstv %s87
    %v280 = vmul.f32 %v279, %v208
    %v281 = vmul.f32 %v279, %v209
    %v282 = vmul.f32 %v279, %v210
    %v283 = vmul.f32 %v279, %v211
    %v284 = vadd.f32 %v275, %v280
    %v285 = vadd.f32 %v276, %v281
    %v286 = vadd.f32 %v277, %v282
    %v287 = vadd.f32 %v278, %v283
    %v288 = vstv %s103
    %v289 = vmul.f32 %v288, %v214
    %v290 = vmul.f32 %v288, %v215
    %v291 = vmul.f32 %v288, %v216
    %v292 = vmul.f32 %v288, %v217
    %v293 = vadd.f32 %v284, %v289
    %v294 = vadd.f32 %v285, %v290
    %v295 = vadd.f32 %v286, %v291
    %v296 = vadd.f32 %v287, %v292
    %v297 = vstv %s119
    %v298 = vadd.f32 %v293, %v297
    %v299 = vadd.f32 %v294, %v297
    %v300 = vadd.f32 %v295, %v297
    %v301 = vadd.f32 %v296, %v297
    %v302 = vmul.f32 %v298, 0.01
    %v303 = vmul.f32 %v299, 0.01
    %v304 = vmul.f32 %v300, 0.01
    %v305 = vmul.f32 %v301, 0.01
    %v306 = vmax.f32 %v298, %v302
    %v307 = vmax.f32 %v299, %v303
    %v308 = vmax.f32 %v300, %v304
    %v309 = vmax.f32 %v301, %v305
    %v310 = vstv %s138
    %v311 = vmul.f32 %v310, %v306
    %v312 = vmul.f32 %v310, %v307
    %v313 = vmul.f32 %v310, %v308
    %v314 = vmul.f32 %v310, %v309
    %v315 = vadd.f32 %v255, %v311
    %v316 = vadd.f32 %v256, %v312
    %v317 = vadd.f32 %v257, %v313
    %v318 = vadd.f32 %v258, %v314
    %v319 = vstv %s139
    %v320 = vmul.f32 %v319, %v306
    %v321 = vmul.f32 %v319, %v307
    %v322 = vmul.f32 %v319, %v308
    %v323 = vmul.f32 %v319, %v309
    %v324 = vadd.f32 %v260, %v320
    %v325 = vadd.f32 %v261, %v321
    %v326 = vadd.f32 %v262, %v322
    %v327 = vadd.f32 %v263, %v323
    %v328 = vstv %s140
    %v329 = vmul.f32 %v328, %v306
    %v330 = vmul.f32 %v328, %v307
    %v331 = vmul.f32 %v328, %v308
    %v332 = vmul.f32 %v328, %v309
    %v333 = vadd.f32 %v265, %v329
    %v334 = vadd.f32 %v266, %v330
    %v335 = vadd.f32 %v267, %v331
    %v336 = vadd.f32 %v268, %v332
    %v337 = vstv %s141
    %v338 = vmul.f32 %v337, %v306
    %v339 = vmul.f32 %v337, %v307
    %v340 = vmul.f32 %v337, %v308
    %v341 = vmul.f32 %v337, %v309
    %v342 = vadd.f32 %v270, %v338
    %v343 = vadd.f32 %v271, %v339
    %v344 = vadd.f32 %v272, %v340
    %v345 = vadd.f32 %v273, %v341
    %v346 = vstv %s72
    %v347 = vmul.f32 %v346, %v202
    %v348 = vmul.f32 %v346, %v203
    %v349 = vmul.f32 %v346, %v204
    %v350 = vmul.f32 %v346, %v205
    %v351 = vstv %s88
    %v352 = vmul.f32 %v351, %v208
    %v353 = vmul.f32 %v351, %v209
    %v354 = vmul.f32 %v351, %v210
    %v355 = vmul.f32 %v351, %v211
    %v356 = vadd.f32 %v347, %v352
    %v357 = vadd.f32 %v348, %v353
    %v358 = vadd.f32 %v349, %v354
    %v359 = vadd.f32 %v350, %v355
    %v360 = vstv %s104
    %v361 = vmul.f32 %v360, %v214
    %v362 = vmul.f32 %v360, %v215
    %v363 = vmul.f32 %v360, %v216
    %v364 = vmul.f32 %v360, %v217
    %v365 = vadd.f32 %v356, %v361
    %v366 = vadd.f32 %v357, %v362
    %v367 = vadd.f32 %v358, %v363
    %v368 = vadd.f32 %v359, %v364
    %v369 = vstv %s120
    %v370 = vadd.f32 %v365, %v369
    %v371 = vadd.f32 %v366, %v369
    %v372 = vadd.f32 %v367, %v369
    %v373 = vadd.f32 %v368, %v369
    %v374 = vmul.f32 %v370, 0.01
    %v375 = vmul.f32 %v371, 0.01
    %v376 = vmul.f32 %v372, 0.01
    %v377 = vmul.f32 %v373, 0.01
    %v378 = vmax.f32 %v370, %v374
    %v379 = vmax.f32 %v371, %v375
    %v380 = vmax.f32 %v372, %v376
    %v381 = vmax.f32 %v373, %v377
    %v382 = vstv %s142
    %v383 = vmul.f32 %v382, %v378
    %v384 = vmul.f32 %v382, %v379
    %v385 = vmul.f32 %v382, %v380
    %v386 = vmul.f32 %v382, %v381
    %v387 = vadd.f32 %v315, %v383
    %v388 = vadd.f32 %v316, %v384
    %v389 = vadd.f32 %v317, %v385
    %v390 = vadd.f32 %v318, %v386
    %v391 = vstv %s143
    %v392 = vmul.f32 %v391, %v378
    %v393 = vmul.f32 %v391, %v379
    %v394 = vmul.f32 %v391, %v380
    %v395 = vmul.f32 %v391, %v381
    %v396 = vadd.f32 %v324, %v392
    %v397 = vadd.f32 %v325, %v393
    %v398 = vadd.f32 %v326, %v394
    %v399 = vadd.f32 %v327, %v395
    %v400 = vstv %s144
    %v401 = vmul.f32 %v400, %v378
    %v402 = vmul.f32 %v400, %v379
    %v403 = vmul.f32 %v400, %v380
    %v404 = vmul.f32 %v400, %v381
    %v405 = vadd.f32 %v333, %v401
    %v406 = vadd.f32 %v334, %v402
    %v407 = vadd.f32 %v335, %v403
    %v408 = vadd.f32 %v336, %v404
    %v409 = vstv %s145
    %v410 = vmul.f32 %v409, %v378
    %v411 = vmul.f32 %v409, %v379
    %v412 = vmul.f32 %v409, %v380
    %v413 = vmul.f32 %v409, %v381
    %v414 = vadd.f32 %v342, %v410
    %v415 = vadd.f32 %v343, %v411
    %v416 = vadd.f32 %v344, %v412
    %v417 = vadd.f32 %v345, %v413
    %v418 = vstv %s73
    %v419 = vmul.f32 %v418, %v202
    %v420 = vmul.f32 %v418, %v203
    %v421 = vmul.f32 %v418, %v204
    %v422 = vmul.f32 %v418, %v205
    %v423 = vstv %s89
    %v424 = vmul.f32 %v423, %v208
    %v425 = vmul.f32 %v423, %v209
    %v426 = vmul.f32 %v423, %v210
    %v427 = vmul.f32 %v423, %v211
    %v428 = vadd.f32 %v419, %v424
    %v429 = vadd.f32 %v420, %v425
    %v430 = vadd.f32 %v421, %v426
    %v431 = vadd.f32 %v422, %v427
    %v432 = vstv %s105
    %v433 = vmul.f32 %v432, %v214
    %v434 = vmul.f32 %v432, %v215
    %v435 = vmul.f32 %v432, %v216
    %v436 = vmul.f32 %v432, %v217
    %v437 = vadd.f32 %v428, %v433
    %v438 = vadd.f32 %v429, %v434
    %v439 = vadd.f32 %v430, %v435
    %v440 = vadd.f32 %v431, %v436
    %v441 = vstv %s121
    %v442 = vadd.f32 %v437, %v441
    %v443 = vadd.f32 %v438, %v441
    %v444 = vadd.f32 %v439, %v441
    %v445 = vadd.f32 %v440, %v441
    %v446 = vmul.f32 %v442, 0.01
    %v447 = vmul.f32 %v443, 0.01
    %v448 = vmul.f32 %v444, 0.01
    %v449 = vmul.f32 %v445, 0.01
    %v450 = vmax.f32 %v442, %v446
    %v451 = vmax.f32 %v443, %v447
    %v452 = vmax.f32 %v444, %v448
    %v453 = vmax.f32 %v445, %v449
    %v454 = vstv %s146
    %v455 = vmul.f32 %v454, %v450
    %v456 = vmul.f32 %v454, %v451
    %v457 = vmul.f32 %v454, %v452
    %v458 = vmul.f32 %v454, %v453
    %v459 = vadd.f32 %v387, %v455
    %v460 = vadd.f32 %v388, %v456
    %v461 = vadd.f32 %v389, %v457
    %v462 = vadd.f32 %v390, %v458
    %v463 = vstv %s147
    %v464 = vmul.f32 %v463, %v450
    %v465 = vmul.f32 %v463, %v451
    %v466 = vmul.f32 %v463, %v452
    %v467 = vmul.f32 %v463, %v453
    %v468 = vadd.f32 %v396, %v464
    %v469 = vadd.f32 %v397, %v465
    %v470 = vadd.f32 %v398, %v466
    %v471 = vadd.f32 %v399, %v467
    %v472 = vstv %s148
    %v473 = vmul.f32 %v472, %v450
    %v474 = vmul.f32 %v472, %v451
    %v475 = vmul.f32 %v472, %v452
    %v476 = vmul.f32 %v472, %v453
    %v477 = vadd.f32 %v405, %v473
    %v478 = vadd.f32 %v406, %v474
    %v479 = vadd.f32 %v407, %v475
    %v480 = vadd.f32 %v408, %v476
    %v481 = vstv %s149
    %v482 = vmul.f32 %v481, %v450
    %v483 = vmul.f32 %v481, %v451
    %v484 = vmul.f32 %v481, %v452
    %v485 = vmul.f32 %v481, %v453
    %v486 = vadd.f32 %v414, %v482
    %v487 = vadd.f32 %v415, %v483
    %v488 = vadd.f32 %v416, %v484
    %v489 = vadd.f32 %v417, %v485
    %v490 = vstv %s74
    %v491 = vmul.f32 %v490, %v202
    %v492 = vmul.f32 %v490, %v203
    %v493 = vmul.f32 %v490, %v204
    %v494 = vmul.f32 %v490, %v205
    %v495 = vstv %s90
    %v496 = vmul.f32 %v495, %v208
    %v497 = vmul.f32 %v495, %v209
    %v498 = vmul.f32 %v495, %v210
    %v499 = vmul.f32 %v495, %v211
    %v500 = vadd.f32 %v491, %v496
    %v501 = vadd.f32 %v492, %v497
    %v502 = vadd.f32 %v493, %v498
    %v503 = vadd.f32 %v494, %v499
    %v504 = vstv %s106
    %v505 = vmul.f32 %v504, %v214
    %v506 = vmul.f32 %v504, %v215
    %v507 = vmul.f32 %v504, %v216
    %v508 = vmul.f32 %v504, %v217
    %v509 = vadd.f32 %v500, %v505
    %v510 = vadd.f32 %v501, %v506
    %v511 = vadd.f32 %v502, %v507
    %v512 = vadd.f32 %v503, %v508
    %v513 = vstv %s122
    %v514 = vadd.f32 %v509, %v513
    %v515 = vadd.f32 %v510, %v513
    %v516 = vadd.f32 %v511, %v513
    %v517 = vadd.f32 %v512, %v513
    %v518 = vmul.f32 %v514, 0.01
    %v519 = vmul.f32 %v515, 0.01
    %v520 = vmul.f32 %v516, 0.01
    %v521 = vmul.f32 %v517, 0.01
    %v522 = vmax.f32 %v514, %v518
    %v523 = vmax.f32 %v515, %v519
    %v524 = vmax.f32 %v516, %v520
    %v525 = vmax.f32 %v517, %v521
    %v526 = vstv %s150
    %v527 = vmul.f32 %v526, %v522
    %v528 = vmul.f32 %v526, %v523
    %v529 = vmul.f32 %v526, %v524
    %v530 = vmul.f32 %v526, %v525
    %v531 = vadd.f32 %v459, %v527
    %v532 = vadd.f32 %v460, %v528
    %v533 = vadd.f32 %v461, %v529
    %v534 = vadd.f32 %v462, %v530
    %v535 = vstv %s151
    %v536 = vmul.f32 %v535, %v522
    %v537 = vmul.f32 %v535, %v523
    %v538 = vmul.f32 %v535, %v524
    %v539 = vmul.f32 %v535, %v525
    %v540 = vadd.f32 %v468, %v536
    %v541 = vadd.f32 %v469, %v537
    %v542 = vadd.f32 %v470, %v538
    %v543 = vadd.f32 %v471, %v539
    %v544 = vstv %s152
    %v545 = vmul.f32 %v544, %v522
    %v546 = vmul.f32 %v544, %v523
    %v547 = vmul.f32 %v544, %v524
    %v548 = vmul.f32 %v544, %v525
    %v549 = vadd.f32 %v477, %v545
    %v550 = vadd.f32 %v478, %v546
    %v551 = vadd.f32 %v479, %v547
    %v552 = vadd.f32 %v480, %v548
    %v553 = vstv %s153
    %v554 = vmul.f32 %v553, %v522
    %v555 = vmul.f32 %v553, %v523
    %v556 = vmul.f32 %v553, %v524
    %v557 = vmul.f32 %v553, %v525
    %v558 = vadd.f32 %v486, %v554
    %v559 = vadd.f32 %v487, %v555
    %v560 = vadd.f32 %v488, %v556
    %v561 = vadd.f32 %v489, %v557
    %v562 = vstv %s75
    %v563 = vmul.f32 %v562, %v202
    %v564 = vmul.f32 %v562, %v203
    %v565 = vmul.f32 %v562, %v204
    %v566 = vmul.f32 %v562, %v205
    %v567 = vstv %s91
    %v568 = vmul.f32 %v567, %v208
    %v569 = vmul.f32 %v567, %v209
    %v570 = vmul.f32 %v567, %v210
    %v571 = vmul.f32 %v567, %v211
    %v572 = vadd.f32 %v563, %v568
    %v573 = vadd.f32 %v564, %v569
    %v574 = vadd.f32 %v565, %v570
    %v575 = vadd.f32 %v566, %v571
    %v576 = vstv %s107
    %v577 = vmul.f32 %v576, %v214
    %v578 = vmul.f32 %v576, %v215
    %v579 = vmul.f32 %v576, %v216
    %v580 = vmul.f32 %v576, %v217
    %v581 = vadd.f32 %v572, %v577
    %v582 = vadd.f32 %v573, %v578
    %v583 = vadd.f32 %v574, %v579
    %v584 = vadd.f32 %v575, %v580
    %v585 = vstv %s123
    %v586 = vadd.f32 %v581, %v585
    %v587 = vadd.f32 %v582, %v585
    %v588 = vadd.f32 %v583, %v585
    %v589 = vadd.f32 %v584, %v585
    %v590 = vmul.f32 %v586, 0.01
    %v591 = vmul.f32 %v587, 0.01
    %v592 = vmul.f32 %v588, 0.01
    %v593 = vmul.f32 %v589, 0.01
    %v594 = vmax.f32 %v586, %v590
    %v595 = vmax.f32 %v587, %v591
    %v596 = vmax.f32 %v588, %v592
    %v597 = vmax.f32 %v589, %v593
    %v598 = vstv %s154
    %v599 = vmul.f32 %v598, %v594
    %v600 = vmul.f32 %v598, %v595
    %v601 = vmul.f32 %v598, %v596
    %v602 = vmul.f32 %v598, %v597
    %v603 = vadd.f32 %v531, %v599
    %v604 = vadd.f32 %v532, %v600
    %v605 = vadd.f32 %v533, %v601
    %v606 = vadd.f32 %v534, %v602
    %v607 = vstv %s155
    %v608 = vmul.f32 %v607, %v594
    %v609 = vmul.f32 %v607, %v595
    %v610 = vmul.f32 %v607, %v596
    %v611 = vmul.f32 %v607, %v597
    %v612 = vadd.f32 %v540, %v608
    %v613 = vadd.f32 %v541, %v609
    %v614 = vadd.f32 %v542, %v610
    %v615 = vadd.f32 %v543, %v611
    %v616 = vstv %s156
    %v617 = vmul.f32 %v616, %v594
    %v618 = vmul.f32 %v616, %v595
    %v619 = vmul.f32 %v616, %v596
    %v620 = vmul.f32 %v616, %v597
    %v621 = vadd.f32 %v549, %v617
    %v622 = vadd.f32 %v550, %v618
    %v623 = vadd.f32 %v551, %v619
    %v624 = vadd.f32 %v552, %v620
    %v625 = vstv %s157
    %v626 = vmul.f32 %v625, %v594
    %v627 = vmul.f32 %v625, %v595
    %v628 = vmul.f32 %v625, %v596
    %v629 = vmul.f32 %v625, %v597
    %v630 = vadd.f32 %v558, %v626
    %v631 = vadd.f32 %v559, %v627
    %v632 = vadd.f32 %v560, %v628
    %v633 = vadd.f32 %v561, %v629
    %v634 = vstv %s76
    %v635 = vmul.f32 %v634, %v202
    %v636 = vmul.f32 %v634, %v203
    %v637 = vmul.f32 %v634, %v204
    %v638 = vmul.f32 %v634, %v205
    %v639 = vstv %s92
    %v640 = vmul.f32 %v639, %v208
    %v641 = vmul.f32 %v639, %v209
    %v642 = vmul.f32 %v639, %v210
    %v643 = vmul.f32 %v639, %v211
    %v644 = vadd.f32 %v635, %v640
    %v645 = vadd.f32 %v636, %v641
    %v646 = vadd.f32 %v637, %v642
    %v647 = vadd.f32 %v638, %v643
    %v648 = vstv %s108
    %v649 = vmul.f32 %v648, %v214
    %v650 = vmul.f32 %v648, %v215
    %v651 = vmul.f32 %v648, %v216
    %v652 = vmul.f32 %v648, %v217
    %v653 = vadd.f32 %v644, %v649
    %v654 = vadd.f32 %v645, %v650
    %v655 = vadd.f32 %v646, %v651
    %v656 = vadd.f32 %v647, %v652
    %v657 = vstv %s124
    %v658 = vadd.f32 %v653, %v657
    %v659 = vadd.f32 %v654, %v657
    %v660 = vadd.f32 %v655, %v657
    %v661 = vadd.f32 %v656, %v657
    %v662 = vmul.f32 %v658, 0.01
    %v663 = vmul.f32 %v659, 0.01
    %v664 = vmul.f32 %v660, 0.01
    %v665 = vmul.f32 %v661, 0.01
    %v666 = vmax.f32 %v658, %v662
    %v667 = vmax.f32 %v659, %v663
    %v668 = vmax.f32 %v660, %v664
    %v669 = vmax.f32 %v661, %v665
    %v670 = vstv %s158
    %v671 = vmul.f32 %v670, %v666
    %v672 = vmul.f32 %v670, %v667
    %v673 = vmul.f32 %v670, %v668
    %v674 = vmul.f32 %v670, %v669
    %v675 = vadd.f32 %v603, %v671
    %v676 = vadd.f32 %v604, %v672
    %v677 = vadd.f32 %v605, %v673
    %v678 = vadd.f32 %v606, %v674
    %v679 = vstv %s159
    %v680 = vmul.f32 %v679, %v666
    %v681 = vmul.f32 %v679, %v667
    %v682 = vmul.f32 %v679, %v668
    %v683 = vmul.f32 %v679, %v669
    %v684 = vadd.f32 %v612, %v680
    %v685 = vadd.f32 %v613, %v681
    %v686 = vadd.f32 %v614, %v682
    %v687 = vadd.f32 %v615, %v683
    %v688 = vstv %s160
    %v689 = vmul.f32 %v688, %v666
    %v690 = vmul.f32 %v688, %v667
    %v691 = vmul.f32 %v688, %v668
    %v692 = vmul.f32 %v688, %v669
    %v693 = vadd.f32 %v621, %v689
    %v694 = vadd.f32 %v622, %v690
    %v695 = vadd.f32 %v623, %v691
    %v696 = vadd.f32 %v624, %v692
    %v697 = vstv %s161
    %v698 = vmul.f32 %v697, %v666
    %v699 = vmul.f32 %v697, %v667
    %v700 = vmul.f32 %v697, %v668
    %v701 = vmul.f32 %v697, %v669
    %v702 = vadd.f32 %v630, %v698
    %v703 = vadd.f32 %v631, %v699
    %v704 = vadd.f32 %v632, %v700
    %v705 = vadd.f32 %v633, %v701
    %v706 = vstv %s77
    %v707 = vmul.f32 %v706, %v202
    %v708 = vmul.f32 %v706, %v203
    %v709 = vmul.f32 %v706, %v204
    %v710 = vmul.f32 %v706, %v205
    %v711 = vstv %s93
    %v712 = vmul.f32 %v711, %v208
    %v713 = vmul.f32 %v711, %v209
    %v714 = vmul.f32 %v711, %v210
    %v715 = vmul.f32 %v711, %v211
    %v716 = vadd.f32 %v707, %v712
    %v717 = vadd.f32 %v708, %v713
    %v718 = vadd.f32 %v709, %v714
    %v719 = vadd.f32 %v710, %v715
    %v720 = vstv %s109
    %v721 = vmul.f32 %v720, %v214
    %v722 = vmul.f32 %v720, %v215
    %v723 = vmul.f32 %v720, %v216
    %v724 = vmul.f32 %v720, %v217
    %v725 = vadd.f32 %v716, %v721
    %v726 = vadd.f32 %v717, %v722
    %v727 = vadd.f32 %v718, %v723
    %v728 = vadd.f32 %v719, %v724
    %v729 = vstv %s125
    %v730 = vadd.f32 %v725, %v729
    %v731 = vadd.f32 %v726, %v729
    %v732 = vadd.f32 %v727, %v729
    %v733 = vadd.f32 %v728, %v729
    %v734 = vmul.f32 %v730, 0.01
    %v735 = vmul.f32 %v731, 0.01
    %v736 = vmul.f32 %v732, 0.01
    %v737 = vmul.f32 %v733, 0.01
    %v738 = vmax.f32 %v730, %v734
    %v739 = vmax.f32 %v731, %v735
    %v740 = vmax.f32 %v732, %v736
    %v741 = vmax.f32 %v733, %v737
    %v742 = vstv %s162
    %v743 = vmul.f32 %v742, %v738
    %v744 = vmul.f32 %v742, %v739
    %v745 = vmul.f32 %v742, %v740
    %v746 = vmul.f32 %v742, %v741
    %v747 = vadd.f32 %v675, %v743
    %v748 = vadd.f32 %v676, %v744
    %v749 = vadd.f32 %v677, %v745
    %v750 = vadd.f32 %v678, %v746
    %v751 = vstv %s163
    %v752 = vmul.f32 %v751, %v738
    %v753 = vmul.f32 %v751, %v739
    %v754 = vmul.f32 %v751, %v740
    %v755 = vmul.f32 %v751, %v741
    %v756 = vadd.f32 %v684, %v752
    %v757 = vadd.f32 %v685, %v753
    %v758 = vadd.f32 %v686, %v754
    %v759 = vadd.f32 %v687, %v755
    %v760 = vstv %s164
    %v761 = vmul.f32 %v760, %v738
    %v762 = vmul.f32 %v760, %v739
    %v763 = vmul.f32 %v760, %v740
    %v764 = vmul.f32 %v760, %v741
    %v765 = vadd.f32 %v693, %v761
    %v766 = vadd.f32 %v694, %v762
    %v767 = vadd.f32 %v695, %v763
    %v768 = vadd.f32 %v696, %v764
    %v769 = vstv %s165
    %v770 = vmul.f32 %v769, %v738
    %v771 = vmul.f32 %v769, %v739
    %v772 = vmul.f32 %v769, %v740
    %v773 = vmul.f32 %v769, %v741
    %v774 = vadd.f32 %v702, %v770
    %v775 = vadd.f32 %v703, %v771
    %v776 = vadd.f32 %v704, %v772
    %v777 = vadd.f32 %v705, %v773
    %v778 = vstv %s78
    %v779 = vmul.f32 %v778, %v202
    %v780 = vmul.f32 %v778, %v203
    %v781 = vmul.f32 %v778, %v204
    %v782 = vmul.f32 %v778, %v205
    %v783 = vstv %s94
    %v784 = vmul.f32 %v783, %v208
    %v785 = vmul.f32 %v783, %v209
    %v786 = vmul.f32 %v783, %v210
    %v787 = vmul.f32 %v783, %v211
    %v788 = vadd.f32 %v779, %v784
    %v789 = vadd.f32 %v780, %v785
    %v790 = vadd.f32 %v781, %v786
    %v791 = vadd.f32 %v782, %v787
    %v792 = vstv %s110
    %v793 = vmul.f32 %v792, %v214
    %v794 = vmul.f32 %v792, %v215
    %v795 = vmul.f32 %v792, %v216
    %v796 = vmul.f32 %v792, %v217
    %v797 = vadd.f32 %v788, %v793
    %v798 = vadd.f32 %v789, %v794
    %v799 = vadd.f32 %v790, %v795
    %v800 = vadd.f32 %v791, %v796
    %v801 = vstv %s126
    %v802 = vadd.f32 %v797, %v801
    %v803 = vadd.f32 %v798, %v801
    %v804 = vadd.f32 %v799, %v801
    %v805 = vadd.f32 %v800, %v801
    %v806 = vmul.f32 %v802, 0.01
    %v807 = vmul.f32 %v803, 0.01
    %v808 = vmul.f32 %v804, 0.01
    %v809 = vmul.f32 %v805, 0.01
    %v810 = vmax.f32 %v802, %v806
    %v811 = vmax.f32 %v803, %v807
    %v812 = vmax.f32 %v804, %v808
    %v813 = vmax.f32 %v805, %v809
    %v814 = vstv %s166
    %v815 = vmul.f32 %v814, %v810
    %v816 = vmul.f32 %v814, %v811
    %v817 = vmul.f32 %v814, %v812
    %v818 = vmul.f32 %v814, %v813
    %v819 = vadd.f32 %v747, %v815
    %v820 = vadd.f32 %v748, %v816
    %v821 = vadd.f32 %v749, %v817
    %v822 = vadd.f32 %v750, %v818
    %v823 = vstv %s167
    %v824 = vmul.f32 %v823, %v810
    %v825 = vmul.f32 %v823, %v811
    %v826 = vmul.f32 %v823, %v812
    %v827 = vmul.f32 %v823, %v813
    %v828 = vadd.f32 %v756, %v824
    %v829 = vadd.f32 %v757, %v825
    %v830 = vadd.f32 %v758, %v826
    %v831 = vadd.f32 %v759, %v827
    %v832 = vstv %s168
    %v833 = vmul.f32 %v832, %v810
    %v834 = vmul.f32 %v832, %v811
    %v835 = vmul.f32 %v832, %v812
    %v836 = vmul.f32 %v832, %v813
    %v837 = vadd.f32 %v765, %v833
    %v838 = vadd.f32 %v766, %v834
    %v839 = vadd.f32 %v767, %v835
    %v840 = vadd.f32 %v768, %v836
    %v841 = vstv %s169
    %v842 = vmul.f32 %v841, %v810
    %v843 = vmul.f32 %v841, %v811
    %v844 = vmul.f32 %v841, %v812
    %v845 = vmul.f32 %v841, %v813
    %v846 = vadd.f32 %v774, %v842
    %v847 = vadd.f32 %v775, %v843
    %v848 = vadd.f32 %v776, %v844
    %v849 = vadd.f32 %v777, %v845
    %v850 = vstv %s79
    %v851 = vmul.f32 %v850, %v202
    %v852 = vmul.f32 %v850, %v203
    %v853 = vmul.f32 %v850, %v204
    %v854 = vmul.f32 %v850, %v205
    %v855 = vstv %s95
    %v856 = vmul.f32 %v855, %v208
    %v857 = vmul.f32 %v855, %v209
    %v858 = vmul.f32 %v855, %v210
    %v859 = vmul.f32 %v855, %v211
    %v860 = vadd.f32 %v851, %v856
    %v861 = vadd.f32 %v852, %v857
    %v862 = vadd.f32 %v853, %v858
    %v863 = vadd.f32 %v854, %v859
    %v864 = vstv %s111
    %v865 = vmul.f32 %v864, %v214
    %v866 = vmul.f32 %v864, %v215
    %v867 = vmul.f32 %v864, %v216
    %v868 = vmul.f32 %v864, %v217
    %v869 = vadd.f32 %v860, %v865
    %v870 = vadd.f32 %v861, %v866
    %v871 = vadd.f32 %v862, %v867
    %v872 = vadd.f32 %v863, %v868
    %v873 = vstv %s127
    %v874 = vadd.f32 %v869, %v873
    %v875 = vadd.f32 %v870, %v873
    %v876 = vadd.f32 %v871, %v873
    %v877 = vadd.f32 %v872, %v873
    %v878 = vmul.f32 %v874, 0.01
    %v879 = vmul.f32 %v875, 0.01
    %v880 = vmul.f32 %v876, 0.01
    %v881 = vmul.f32 %v877, 0.01
    %v882 = vmax.f32 %v874, %v878
    %v883 = vmax.f32 %v875, %v879
    %v884 = vmax.f32 %v876, %v880
    %v885 = vmax.f32 %v877, %v881
    %v886 = vstv %s170
    %v887 = vmul.f32 %v886, %v882
    %v888 = vmul.f32 %v886, %v883
    %v889 = vmul.f32 %v886, %v884
    %v890 = vmul.f32 %v886, %v885
    %v891 = vadd.f32 %v819, %v887
    %v892 = vadd.f32 %v820, %v888
    %v893 = vadd.f32 %v821, %v889
    %v894 = vadd.f32 %v822, %v890
    %v895 = vstv %s171
    %v896 = vmul.f32 %v895, %v882
    %v897 = vmul.f32 %v895, %v883
    %v898 = vmul.f32 %v895, %v884
    %v899 = vmul.f32 %v895, %v885
    %v900 = vadd.f32 %v828, %v896
    %v901 = vadd.f32 %v829, %v897
    %v902 = vadd.f32 %v830, %v898
    %v903 = vadd.f32 %v831, %v899
    %v904 = vstv %s172
    %v905 = vmul.f32 %v904, %v882
    %v906 = vmul.f32 %v904, %v883
    %v907 = vmul.f32 %v904, %v884
    %v908 = vmul.f32 %v904, %v885
    %v909 = vadd.f32 %v837, %v905
    %v910 = vadd.f32 %v838, %v906
    %v911 = vadd.f32 %v839, %v907
    %v912 = vadd.f32 %v840, %v908
    %v913 = vstv %s173
    %v914 = vmul.f32 %v913, %v882
    %v915 = vmul.f32 %v913, %v883
    %v916 = vmul.f32 %v913, %v884
    %v917 = vmul.f32 %v913, %v885
    %v918 = vadd.f32 %v846, %v914
    %v919 = vadd.f32 %v847, %v915
    %v920 = vadd.f32 %v848, %v916
    %v921 = vadd.f32 %v849, %v917
    %v922 = vstv %s80
    %v923 = vmul.f32 %v922, %v202
    %v924 = vmul.f32 %v922, %v203
    %v925 = vmul.f32 %v922, %v204
    %v926 = vmul.f32 %v922, %v205
    %v927 = vstv %s96
    %v928 = vmul.f32 %v927, %v208
    %v929 = vmul.f32 %v927, %v209
    %v930 = vmul.f32 %v927, %v210
    %v931 = vmul.f32 %v927, %v211
    %v932 = vadd.f32 %v923, %v928
    %v933 = vadd.f32 %v924, %v929
    %v934 = vadd.f32 %v925, %v930
    %v935 = vadd.f32 %v926, %v931
    %v936 = vstv %s112
    %v937 = vmul.f32 %v936, %v214
    %v938 = vmul.f32 %v936, %v215
    %v939 = vmul.f32 %v936, %v216
    %v940 = vmul.f32 %v936, %v217
    %v941 = vadd.f32 %v932, %v937
    %v942 = vadd.f32 %v933, %v938
    %v943 = vadd.f32 %v934, %v939
    %v944 = vadd.f32 %v935, %v940
    %v945 = vstv %s128
    %v946 = vadd.f32 %v941, %v945
    %v947 = vadd.f32 %v942, %v945
    %v948 = vadd.f32 %v943, %v945
    %v949 = vadd.f32 %v944, %v945
    %v950 = vmul.f32 %v946, 0.01
    %v951 = vmul.f32 %v947, 0.01
    %v952 = vmul.f32 %v948, 0.01
    %v953 = vmul.f32 %v949, 0.01
    %v954 = vmax.f32 %v946, %v950
    %v955 = vmax.f32 %v947, %v951
    %v956 = vmax.f32 %v948, %v952
    %v957 = vmax.f32 %v949, %v953
    %v958 = vstv %s174
    %v959 = vmul.f32 %v958, %v954
    %v960 = vmul.f32 %v958, %v955
    %v961 = vmul.f32 %v958, %v956
    %v962 = vmul.f32 %v958, %v957
    %v963 = vadd.f32 %v891, %v959
    %v964 = vadd.f32 %v892, %v960
    %v965 = vadd.f32 %v893, %v961
    %v966 = vadd.f32 %v894, %v962
    %v967 = vstv %s175
    %v968 = vmul.f32 %v967, %v954
    %v969 = vmul.f32 %v967, %v955
    %v970 = vmul.f32 %v967, %v956
    %v971 = vmul.f32 %v967, %v957
    %v972 = vadd.f32 %v900, %v968
    %v973 = vadd.f32 %v901, %v969
    %v974 = vadd.f32 %v902, %v970
    %v975 = vadd.f32 %v903, %v971
    %v976 = vstv %s176
    %v977 = vmul.f32 %v976, %v954
    %v978 = vmul.f32 %v976, %v955
    %v979 = vmul.f32 %v976, %v956
    %v980 = vmul.f32 %v976, %v957
    %v981 = vadd.f32 %v909, %v977
    %v982 = vadd.f32 %v910, %v978
    %v983 = vadd.f32 %v911, %v979
    %v984 = vadd.f32 %v912, %v980
    %v985 = vstv %s177
    %v986 = vmul.f32 %v985, %v954
    %v987 = vmul.f32 %v985, %v955
    %v988 = vmul.f32 %v985, %v956
    %v989 = vmul.f32 %v985, %v957
    %v990 = vadd.f32 %v918, %v986
    %v991 = vadd.f32 %v919, %v987
    %v992 = vadd.f32 %v920, %v988
    %v993 = vadd.f32 %v921, %v989
    %v994 = vstv %s81
    %v995 = vmul.f32 %v994, %v202
    %v996 = vmul.f32 %v994, %v203
    %v997 = vmul.f32 %v994, %v204
    %v998 = vmul.f32 %v994, %v205
    %v999 = vstv %s97
    %v1000 = vmul.f32 %v999, %v208
    %v1001 = vmul.f32 %v999, %v209
    %v1002 = vmul.f32 %v999, %v210
    %v1003 = vmul.f32 %v999, %v211
    %v1004 = vadd.f32 %v995, %v1000
    %v1005 = vadd.f32 %v996, %v1001
    %v1006 = vadd.f32 %v997, %v1002
    %v1007 = vadd.f32 %v998, %v1003
    %v1008 = vstv %s113
    %v1009 = vmul.f32 %v1008, %v214
    %v1010 = vmul.f32 %v1008, %v215
    %v1011 = vmul.f32 %v1008, %v216
    %v1012 = vmul.f32 %v1008, %v217
    %v1013 = vadd.f32 %v1004, %v1009
    %v1014 = vadd.f32 %v1005, %v1010
    %v1015 = vadd.f32 %v1006, %v1011
    %v1016 = vadd.f32 %v1007, %v1012
    %v1017 = vstv %s129
    %v1018 = vadd.f32 %v1013, %v1017
    %v1019 = vadd.f32 %v1014, %v1017
    %v1020 = vadd.f32 %v1015, %v1017
    %v1021 = vadd.f32 %v1016, %v1017
    %v1022 = vmul.f32 %v1018, 0.01
    %v1023 = vmul.f32 %v1019, 0.01
    %v1024 = vmul.f32 %v1020, 0.01
    %v1025 = vmul.f32 %v1021, 0.01
    %v1026 = vmax.f32 %v1018, %v1022
    %v1027 = vmax.f32 %v1019, %v1023
    %v1028 = vmax.f32 %v1020, %v1024
    %v1029 = vmax.f32 %v1021, %v1025
    %v1030 = vstv %s178
    %v1031 = vmul.f32 %v1030, %v1026
    %v1032 = vmul.f32 %v1030, %v1027
    %v1033 = vmul.f32 %v1030, %v1028
    %v1034 = vmul.f32 %v1030, %v1029
    %v1035 = vadd.f32 %v963, %v1031
    %v1036 = vadd.f32 %v964, %v1032
    %v1037 = vadd.f32 %v965, %v1033
    %v1038 = vadd.f32 %v966, %v1034
    %v1039 = vstv %s179
    %v1040 = vmul.f32 %v1039, %v1026
    %v1041 = vmul.f32 %v1039, %v1027
    %v1042 = vmul.f32 %v1039, %v1028
    %v1043 = vmul.f32 %v1039, %v1029
    %v1044 = vadd.f32 %v972, %v1040
    %v1045 = vadd.f32 %v973, %v1041
    %v1046 = vadd.f32 %v974, %v1042
    %v1047 = vadd.f32 %v975, %v1043
    %v1048 = vstv %s180
    %v1049 = vmul.f32 %v1048, %v1026
    %v1050 = vmul.f32 %v1048, %v1027
    %v1051 = vmul.f32 %v1048, %v1028
    %v1052 = vmul.f32 %v1048, %v1029
    %v1053 = vadd.f32 %v981, %v1049
    %v1054 = vadd.f32 %v982, %v1050
    %v1055 = vadd.f32 %v983, %v1051
    %v1056 = vadd.f32 %v984, %v1052
    %v1057 = vstv %s181
    %v1058 = vmul.f32 %v1057, %v1026
    %v1059 = vmul.f32 %v1057, %v1027
    %v1060 = vmul.f32 %v1057, %v1028
    %v1061 = vmul.f32 %v1057, %v1029
    %v1062 = vadd.f32 %v990, %v1058
    %v1063 = vadd.f32 %v991, %v1059
    %v1064 = vadd.f32 %v992, %v1060
    %v1065 = vadd.f32 %v993, %v1061
    %v1066 = vstv %s82
    %v1067 = vmul.f32 %v1066, %v202
    %v1068 = vmul.f32 %v1066, %v203
    %v1069 = vmul.f32 %v1066, %v204
    %v1070 = vmul.f32 %v1066, %v205
    %v1071 = vstv %s98
    %v1072 = vmul.f32 %v1071, %v208
    %v1073 = vmul.f32 %v1071, %v209
    %v1074 = vmul.f32 %v1071, %v210
    %v1075 = vmul.f32 %v1071, %v211
    %v1076 = vadd.f32 %v1067, %v1072
    %v1077 = vadd.f32 %v1068, %v1073
    %v1078 = vadd.f32 %v1069, %v1074
    %v1079 = vadd.f32 %v1070, %v1075
    %v1080 = vstv %s114
    %v1081 = vmul.f32 %v1080, %v214
    %v1082 = vmul.f32 %v1080, %v215
    %v1083 = vmul.f32 %v1080, %v216
    %v1084 = vmul.f32 %v1080, %v217
    %v1085 = vadd.f32 %v1076, %v1081
    %v1086 = vadd.f32 %v1077, %v1082
    %v1087 = vadd.f32 %v1078, %v1083
    %v1088 = vadd.f32 %v1079, %v1084
    %v1089 = vstv %s130
    %v1090 = vadd.f32 %v1085, %v1089
    %v1091 = vadd.f32 %v1086, %v1089
    %v1092 = vadd.f32 %v1087, %v1089
    %v1093 = vadd.f32 %v1088, %v1089
    %v1094 = vmul.f32 %v1090, 0.01
    %v1095 = vmul.f32 %v1091, 0.01
    %v1096 = vmul.f32 %v1092, 0.01
    %v1097 = vmul.f32 %v1093, 0.01
    %v1098 = vmax.f32 %v1090, %v1094
    %v1099 = vmax.f32 %v1091, %v1095
    %v1100 = vmax.f32 %v1092, %v1096
    %v1101 = vmax.f32 %v1093, %v1097
    %v1102 = vstv %s182
    %v1103 = vmul.f32 %v1102, %v1098
    %v1104 = vmul.f32 %v1102, %v1099
    %v1105 = vmul.f32 %v1102, %v1100
    %v1106 = vmul.f32 %v1102, %v1101
    %v1107 = vadd.f32 %v1035, %v1103
    %v1108 = vadd.f32 %v1036, %v1104
    %v1109 = vadd.f32 %v1037, %v1105
    %v1110 = vadd.f32 %v1038, %v1106
    %v1111 = vstv %s183
    %v1112 = vmul.f32 %v1111, %v1098
    %v1113 = vmul.f32 %v1111, %v1099
    %v1114 = vmul.f32 %v1111, %v1100
    %v1115 = vmul.f32 %v1111, %v1101
    %v1116 = vadd.f32 %v1044, %v1112
    %v1117 = vadd.f32 %v1045, %v1113
    %v1118 = vadd.f32 %v1046, %v1114
    %v1119 = vadd.f32 %v1047, %v1115
    %v1120 = vstv %s184
    %v1121 = vmul.f32 %v1120, %v1098
    %v1122 = vmul.f32 %v1120, %v1099
    %v1123 = vmul.f32 %v1120, %v1100
    %v1124 = vmul.f32 %v1120, %v1101
    %v1125 = vadd.f32 %v1053, %v1121
    %v1126 = vadd.f32 %v1054, %v1122
    %v1127 = vadd.f32 %v1055, %v1123
    %v1128 = vadd.f32 %v1056, %v1124
    %v1129 = vstv %s185
    %v1130 = vmul.f32 %v1129, %v1098
    %v1131 = vmul.f32 %v1129, %v1099
    %v1132 = vmul.f32 %v1129, %v1100
    %v1133 = vmul.f32 %v1129, %v1101
    %v1134 = vadd.f32 %v1062, %v1130
    %v1135 = vadd.f32 %v1063, %v1131
    %v1136 = vadd.f32 %v1064, %v1132
    %v1137 = vadd.f32 %v1065, %v1133
    %v1138 = vstv %s83
    %v1139 = vmul.f32 %v1138, %v202
    %v1140 = vmul.f32 %v1138, %v203
    %v1141 = vmul.f32 %v1138, %v204
    %v1142 = vmul.f32 %v1138, %v205
    %v1143 = vstv %s99
    %v1144 = vmul.f32 %v1143, %v208
    %v1145 = vmul.f32 %v1143, %v209
    %v1146 = vmul.f32 %v1143, %v210
    %v1147 = vmul.f32 %v1143, %v211
    %v1148 = vadd.f32 %v1139, %v1144
    %v1149 = vadd.f32 %v1140, %v1145
    %v1150 = vadd.f32 %v1141, %v1146
    %v1151 = vadd.f32 %v1142, %v1147
    %v1152 = vstv %s115
    %v1153 = vmul.f32 %v1152, %v214
    %v1154 = vmul.f32 %v1152, %v215
    %v1155 = vmul.f32 %v1152, %v216
    %v1156 = vmul.f32 %v1152, %v217
    %v1157 = vadd.f32 %v1148, %v1153
    %v1158 = vadd.f32 %v1149, %v1154
    %v1159 = vadd.f32 %v1150, %v1155
    %v1160 = vadd.f32 %v1151, %v1156
    %v1161 = vstv %s131
    %v1162 = vadd.f32 %v1157, %v1161
    %v1163 = vadd.f32 %v1158, %v1161
    %v1164 = vadd.f32 %v1159, %v1161
    %v1165 = vadd.f32 %v1160, %v1161
    %v1166 = vmul.f32 %v1162, 0.01
    %v1167 = vmul.f32 %v1163, 0.01
    %v1168 = vmul.f32 %v1164, 0.01
    %v1169 = vmul.f32 %v1165, 0.01
    %v1170 = vmax.f32 %v1162, %v1166
    %v1171 = vmax.f32 %v1163, %v1167
    %v1172 = vmax.f32 %v1164, %v1168
    %v1173 = vmax.f32 %v1165, %v1169
    %v1174 = vstv %s186
    %v1175 = vmul.f32 %v1174, %v1170
    %v1176 = vmul.f32 %v1174, %v1171
    %v1177 = vmul.f32 %v1174, %v1172
    %v1178 = vmul.f32 %v1174, %v1173
    %v1179 = vadd.f32 %v1107, %v1175
    %v1180 = vadd.f32 %v1108, %v1176
    %v1181 = vadd.f32 %v1109, %v1177
    %v1182 = vadd.f32 %v1110, %v1178
    %v1183 = vstv %s187
    %v1184 = vmul.f32 %v1183, %v1170
    %v1185 = vmul.f32 %v1183, %v1171
    %v1186 = vmul.f32 %v1183, %v1172
    %v1187 = vmul.f32 %v1183, %v1173
    %v1188 = vadd.f32 %v1116, %v1184
    %v1189 = vadd.f32 %v1117, %v1185
    %v1190 = vadd.f32 %v1118, %v1186
    %v1191 = vadd.f32 %v1119, %v1187
    %v1192 = vstv %s188
    %v1193 = vmul.f32 %v1192, %v1170
    %v1194 = vmul.f32 %v1192, %v1171
    %v1195 = vmul.f32 %v1192, %v1172
    %v1196 = vmul.f32 %v1192, %v1173
    %v1197 = vadd.f32 %v1125, %v1193
    %v1198 = vadd.f32 %v1126, %v1194
    %v1199 = vadd.f32 %v1127, %v1195
    %v1200 = vadd.f32 %v1128, %v1196
    %v1201 = vstv %s189
    %v1202 = vmul.f32 %v1201, %v1170
    %v1203 = vmul.f32 %v1201, %v1171
    %v1204 = vmul.f32 %v1201, %v1172
    %v1205 = vmul.f32 %v1201, %v1173
    %v1206 = vadd.f32 %v1134, %v1202
    %v1207 = vadd.f32 %v1135, %v1203
    %v1208 = vadd.f32 %v1136, %v1204
    %v1209 = vadd.f32 %v1137, %v1205
    %v1210 = vstv %s84
    %v1211 = vmul.f32 %v1210, %v202
    %v1212 = vmul.f32 %v1210, %v203
    %v1213 = vmul.f32 %v1210, %v204
    %v1214 = vmul.f32 %v1210, %v205
    %v1215 = vstv %s100
    %v1216 = vmul.f32 %v1215, %v208
    %v1217 = vmul.f32 %v1215, %v209
    %v1218 = vmul.f32 %v1215, %v210
    %v1219 = vmul.f32 %v1215, %v211
    %v1220 = vadd.f32 %v1211, %v1216
    %v1221 = vadd.f32 %v1212, %v1217
    %v1222 = vadd.f32 %v1213, %v1218
    %v1223 = vadd.f32 %v1214, %v1219
    %v1224 = vstv %s116
    %v1225 = vmul.f32 %v1224, %v214
    %v1226 = vmul.f32 %v1224, %v215
    %v1227 = vmul.f32 %v1224, %v216
    %v1228 = vmul.f32 %v1224, %v217
    %v1229 = vadd.f32 %v1220, %v1225
    %v1230 = vadd.f32 %v1221, %v1226
    %v1231 = vadd.f32 %v1222, %v1227
    %v1232 = vadd.f32 %v1223, %v1228
    %v1233 = vstv %s132
    %v1234 = vadd.f32 %v1229, %v1233
    %v1235 = vadd.f32 %v1230, %v1233
    %v1236 = vadd.f32 %v1231, %v1233
    %v1237 = vadd.f32 %v1232, %v1233
    %v1238 = vmul.f32 %v1234, 0.01
    %v1239 = vmul.f32 %v1235, 0.01
    %v1240 = vmul.f32 %v1236, 0.01
    %v1241 = vmul.f32 %v1237, 0.01
    %v1242 = vmax.f32 %v1234, %v1238
    %v1243 = vmax.f32 %v1235, %v1239
    %v1244 = vmax.f32 %v1236, %v1240
    %v1245 = vmax.f32 %v1237, %v1241
    %v1246 = vstv %s190
    %v1247 = vmul.f32 %v1246, %v1242
    %v1248 = vmul.f32 %v1246, %v1243
    %v1249 = vmul.f32 %v1246, %v1244
    %v1250 = vmul.f32 %v1246, %v1245
    %v1251 = vadd.f32 %v1179, %v1247
    %v1252 = vadd.f32 %v1180, %v1248
    %v1253 = vadd.f32 %v1181, %v1249
    %v1254 = vadd.f32 %v1182, %v1250
    %v1255 = vstv %s191
    %v1256 = vmul.f32 %v1255, %v1242
    %v1257 = vmul.f32 %v1255, %v1243
    %v1258 = vmul.f32 %v1255, %v1244
    %v1259 = vmul.f32 %v1255, %v1245
    %v1260 = vadd.f32 %v1188, %v1256
    %v1261 = vadd.f32 %v1189, %v1257
    %v1262 = vadd.f32 %v1190, %v1258
    %v1263 = vadd.f32 %v1191, %v1259
    %v1264 = vstv %s192
    %v1265 = vmul.f32 %v1264, %v1242
    %v1266 = vmul.f32 %v1264, %v1243
    %v1267 = vmul.f32 %v1264, %v1244
    %v1268 = vmul.f32 %v1264, %v1245
    %v1269 = vadd.f32 %v1197, %v1265
    %v1270 = vadd.f32 %v1198, %v1266
    %v1271 = vadd.f32 %v1199, %v1267
    %v1272 = vadd.f32 %v1200, %v1268
    %v1273 = vstv %s193
    %v1274 = vmul.f32 %v1273, %v1242
    %v1275 = vmul.f32 %v1273, %v1243
    %v1276 = vmul.f32 %v1273, %v1244
    %v1277 = vmul.f32 %v1273, %v1245
    %v1278 = vadd.f32 %v1206, %v1274
    %v1279 = vadd.f32 %v1207, %v1275
    %v1280 = vadd.f32 %v1208, %v1276
    %v1281 = vadd.f32 %v1209, %v1277
    %v1282 = vstv %s85
    %v1283 = vmul.f32 %v1282, %v202
    %v1284 = vmul.f32 %v1282, %v203
    %v1285 = vmul.f32 %v1282, %v204
    %v1286 = vmul.f32 %v1282, %v205
    %v1287 = vstv %s101
    %v1288 = vmul.f32 %v1287, %v208
    %v1289 = vmul.f32 %v1287, %v209
    %v1290 = vmul.f32 %v1287, %v210
    %v1291 = vmul.f32 %v1287, %v211
    %v1292 = vadd.f32 %v1283, %v1288
    %v1293 = vadd.f32 %v1284, %v1289
    %v1294 = vadd.f32 %v1285, %v1290
    %v1295 = vadd.f32 %v1286, %v1291
    %v1296 = vstv %s117
    %v1297 = vmul.f32 %v1296, %v214
    %v1298 = vmul.f32 %v1296, %v215
    %v1299 = vmul.f32 %v1296, %v216
    %v1300 = vmul.f32 %v1296, %v217
    %v1301 = vadd.f32 %v1292, %v1297
    %v1302 = vadd.f32 %v1293, %v1298
    %v1303 = vadd.f32 %v1294, %v1299
    %v1304 = vadd.f32 %v1295, %v1300
    %v1305 = vstv %s133
    %v1306 = vadd.f32 %v1301, %v1305
    %v1307 = vadd.f32 %v1302, %v1305
    %v1308 = vadd.f32 %v1303, %v1305
    %v1309 = vadd.f32 %v1304, %v1305
    %v1310 = vmul.f32 %v1306, 0.01
    %v1311 = vmul.f32 %v1307, 0.01
    %v1312 = vmul.f32 %v1308, 0.01
    %v1313 = vmul.f32 %v1309, 0.01
    %v1314 = vmax.f32 %v1306, %v1310
    %v1315 = vmax.f32 %v1307, %v1311
    %v1316 = vmax.f32 %v1308, %v1312
    %v1317 = vmax.f32 %v1309, %v1313
    %v1318 = vstv %s194
    %v1319 = vmul.f32 %v1318, %v1314
    %v1320 = vmul.f32 %v1318, %v1315
    %v1321 = vmul.f32 %v1318, %v1316
    %v1322 = vmul.f32 %v1318, %v1317
    %v1323 = vadd.f32 %v1251, %v1319
    %v1324 = vadd.f32 %v1252, %v1320
    %v1325 = vadd.f32 %v1253, %v1321
    %v1326 = vadd.f32 %v1254, %v1322
    %v1327 = vstv %s195
    %v1328 = vmul.f32 %v1327, %v1314
    %v1329 = vmul.f32 %v1327, %v1315
    %v1330 = vmul.f32 %v1327, %v1316
    %v1331 = vmul.f32 %v1327, %v1317
    %v1332 = vadd.f32 %v1260, %v1328
    %v1333 = vadd.f32 %v1261, %v1329
    %v1334 = vadd.f32 %v1262, %v1330
    %v1335 = vadd.f32 %v1263, %v1331
    %v1336 = vstv %s196
    %v1337 = vmul.f32 %v1336, %v1314
    %v1338 = vmul.f32 %v1336, %v1315
    %v1339 = vmul.f32 %v1336, %v1316
    %v1340 = vmul.f32 %v1336, %v1317
    %v1341 = vadd.f32 %v1269, %v1337
    %v1342 = vadd.f32 %v1270, %v1338
    %v1343 = vadd.f32 %v1271, %v1339
    %v1344 = vadd.f32 %v1272, %v1340
    %v1345 = vstv %s197
    %v1346 = vmul.f32 %v1345, %v1314
    %v1347 = vmul.f32 %v1345, %v1315
    %v1348 = vmul.f32 %v1345, %v1316
    %v1349 = vmul.f32 %v1345, %v1317
    %v1350 = vadd.f32 %v1278, %v1346
    %v1351 = vadd.f32 %v1279, %v1347
    %v1352 = vadd.f32 %v1280, %v1348
    %v1353 = vadd.f32 %v1281, %v1349
    %v1354 = vstv %s198
    %v1355 = vadd.f32 %v1323, %v1354
    %v1356 = vadd.f32 %v1324, %v1354
    %v1357 = vadd.f32 %v1325, %v1354
    %v1358 = vadd.f32 %v1326, %v1354
    %1359 = vst [vmem:[%s5] sm:$0xff] %v1355
    %1360 = vst [vmem:[%s5 + $0x8] sm:$0xff] %v1356
    %1361 = vst [vmem:[%s5 + $0x10] sm:$0xff] %v1357
    %1362 = vst [vmem:[%s5 + $0x18] sm:$0xff] %v1358
    %v1363 = vstv %s199
    %v1364 = vadd.f32 %v1332, %v1363
    %v1365 = vadd.f32 %v1333, %v1363
    %v1366 = vadd.f32 %v1334, %v1363
    %v1367 = vadd.f32 %v1335, %v1363
    %s1368 = scalar_lea.vmem %s5, %s206
    %1369 = vst [vmem:[%s1368] sm:$0xff] %v1364
    %1370 = vst [vmem:[%s1368 + $0x8] sm:$0xff] %v1365
    %1371 = vst [vmem:[%s1368 + $0x10] sm:$0xff] %v1366
    %1372 = vst [vmem:[%s1368 + $0x18] sm:$0xff] %v1367
    %v1373 = vstv %s200
    %v1374 = vadd.f32 %v1341, %v1373
    %v1375 = vadd.f32 %v1342, %v1373
    %v1376 = vadd.f32 %v1343, %v1373
    %v1377 = vadd.f32 %v1344, %v1373
    %s1378 = scalar_lea.vmem %s5, %s212
    %1379 = vst [vmem:[%s1378] sm:$0xff] %v1374
    %1380 = vst [vmem:[%s1378 + $0x8] sm:$0xff] %v1375
    %1381 = vst [vmem:[%s1378 + $0x10] sm:$0xff] %v1376
    %1382 = vst [vmem:[%s1378 + $0x18] sm:$0xff] %v1377
    %v1383 = vstv %s201
    %v1384 = vadd.f32 %v1350, %v1383
    %v1385 = vadd.f32 %v1351, %v1383
    %v1386 = vadd.f32 %v1352, %v1383
    %v1387 = vadd.f32 %v1353, %v1383
    %s1388 = sadd.s32 0, 96
    %s1389 = scalar_lea.vmem %s5, %s1388
    %1390 = vst [vmem:[%s1389] sm:$0xff] %v1384
    %1391 = vst [vmem:[%s1389 + $0x8] sm:$0xff] %v1385
    %1392 = vst [vmem:[%s1389 + $0x10] sm:$0xff] %v1386
    %1393 = vst [vmem:[%s1389 + $0x18] sm:$0xff] %v1387
    // Predicated region
    $region38: #{model_forward.1} parent=1 // pred_check
      _
    $region39: #{model_forward.1} parent=1 // pred_check_branch
      %1395 = sbr.rel (0) target = $region41
    $region40: #{model_forward.1} parent=1 // pred_region
      _
    $region41: #{model_forward.1} parent=1 // pred_fallthru
      _
    // Predicated region
    $region42: #{model_forward.1} parent=1 // pred_check
      _
    $region43: #{model_forward.1} parent=1 // pred_check_branch
      %1397 = sbr.rel (0) target = $region45
    $region44: #{model_forward.1} parent=1 // pred_region
      _
    $region45: #{model_forward.1} parent=1 // pred_fallthru
      _
    %1398 = vsyncpa [#allocation3], 1
    %1399 = vsyncpa [#allocation5], 1
    %1400 = vsyncpa [#allocation8], 1

</llo_original>
